<compile_context>
chip_gen: v7x
topology: tpu7x:2x2x1
jax: 0.10.0
libtpu: 0.0.40
codegen_flags: <defaults>
</compile_context>

<pallas_src>
import jax
import jax.numpy as jnp
from jax.experimental import pallas as pl
from jax.experimental.pallas import tpu as pltpu


# --------------------------------------------------------------------------
# Pallas kernel 1: tiled matmul, bf16 operands, f32 accumulation
# --------------------------------------------------------------------------
def _matmul_kernel(a_ref, b_ref, o_ref, acc_ref):
    @pl.when(pl.program_id(2) == 0)
    def _():
        acc_ref[...] = jnp.zeros_like(acc_ref)

    acc_ref[...] += jnp.dot(a_ref[...], b_ref[...],
                            preferred_element_type=jnp.float32)

    @pl.when(pl.program_id(2) == pl.num_programs(2) - 1)
    def _():
        o_ref[...] = acc_ref[...]


def _round_up(x, m):
    return ((x + m - 1) // m) * m


def pallas_matmul(a, b, tm_cap=256, tn_cap=256, tk_cap=512):
    """(M,K)@(K,N) -> f32 (M,N). bf16 MXU inputs, f32 acc, zero-padded tiles."""
    M, K = a.shape
    K2, N = b.shape
    assert K == K2
    tm = min(tm_cap, _round_up(M, 128))
    tn = min(tn_cap, _round_up(N, 128))
    tk = min(tk_cap, _round_up(K, 128))
    Mp, Np, Kp = _round_up(M, tm), _round_up(N, tn), _round_up(K, tk)
    a_p = jnp.pad(a.astype(jnp.bfloat16), ((0, Mp - M), (0, Kp - K)))
    b_p = jnp.pad(b.astype(jnp.bfloat16), ((0, Kp - K), (0, Np - N)))
    out = pl.pallas_call(
        _matmul_kernel,
        out_shape=jax.ShapeDtypeStruct((Mp, Np), jnp.float32),
        grid_spec=pltpu.PrefetchScalarGridSpec(
            num_scalar_prefetch=0,
            grid=(Mp // tm, Np // tn, Kp // tk),
            in_specs=[pl.BlockSpec((tm, tk), lambda i, j, k: (i, k)),
                      pl.BlockSpec((tk, tn), lambda i, j, k: (k, j))],
            out_specs=pl.BlockSpec((tm, tn), lambda i, j, k: (i, j)),
            scratch_shapes=[pltpu.VMEM((tm, tn), jnp.float32)]),
        compiler_params=pltpu.CompilerParams(
            dimension_semantics=("parallel", "parallel", "arbitrary")),
    )(a_p, b_p)
    return out[:M, :N]


# --------------------------------------------------------------------------
# Pallas kernel 2: batched (per-group) matmul for the grouped dep_conv
#   (G, M, K) @ (G, K, N) with small K, N (single block each)
# --------------------------------------------------------------------------
def _bmm_kernel(a_ref, b_ref, o_ref):
    o_ref[0] = jnp.dot(a_ref[0], b_ref[0], preferred_element_type=jnp.float32)


def pallas_batched_matmul(a, b, tm_cap=256):
    G, M, K = a.shape
    G2, K2, N = b.shape
    assert G == G2 and K == K2
    tm = min(tm_cap, _round_up(M, 128))
    Mp = _round_up(M, tm)
    a_p = jnp.pad(a.astype(jnp.bfloat16), ((0, 0), (0, Mp - M), (0, 0)))
    b_p = b.astype(jnp.bfloat16)
    out = pl.pallas_call(
        _bmm_kernel,
        out_shape=jax.ShapeDtypeStruct((G, Mp, N), jnp.float32),
        grid_spec=pltpu.PrefetchScalarGridSpec(
            num_scalar_prefetch=0,
            grid=(G, Mp // tm),
            in_specs=[pl.BlockSpec((1, tm, K), lambda g, i: (g, i, 0)),
                      pl.BlockSpec((1, K, N), lambda g, i: (g, 0, 0))],
            out_specs=pl.BlockSpec((1, tm, N), lambda g, i: (g, i, 0))),
        compiler_params=pltpu.CompilerParams(
            dimension_semantics=("parallel", "parallel")),
    )(a_p, b_p)
    return out[:, :M, :]


# --------------------------------------------------------------------------
# Pallas kernel 3: ACmix local-window attention (lane-dense: N in lanes)
#   logits[kk, n] = sum_d q[d, n] * (kw[d, kk, n] + (pe - rpe)[d, kk, n])
#   att = softmax_kk(logits);  out[d, n] = sum_kk att[kk, n] * vw[d, kk, n]
# --------------------------------------------------------------------------
def _window_attn_kernel(q_ref, kw_ref, vw_ref, per_ref, o_ref):
    q = q_ref[0]                                     # (hd, tN), pre-scaled
    kw = kw_ref[0]                                   # (hd, KK, tN)
    vw = vw_ref[0]                                   # (hd, KK, tN)
    per = per_ref[...]                               # (hd, KK, tN)  == pe - rpe

    t = kw + per
    logits = jnp.sum(q[:, None, :] * t, axis=0)      # (KK, tN)  -- N lane-dense
    m = jnp.max(logits, axis=0, keepdims=True)       # (1, tN)
    p = jnp.exp(logits - m)
    inv = pl.reciprocal(jnp.sum(p, axis=0, keepdims=True), approx=True)
    att = p * inv                                    # softmax over window taps
    o_ref[0] = jnp.sum(att[None, :, :] * vw, axis=1)  # (hd, tN)


def _pick_n_tile(n):
    if n % 128 != 0:
        return n
    for t in (512, 256, 128):
        if n % t == 0:
            return t
    return n


def pallas_window_attention(q, kw, vw, per):
    BH, hd, N = q.shape
    KK = kw.shape[2]
    tN = _pick_n_tile(N)
    return pl.pallas_call(
        _window_attn_kernel,
        out_shape=jax.ShapeDtypeStruct((BH, hd, N), jnp.float32),
        grid_spec=pltpu.PrefetchScalarGridSpec(
            num_scalar_prefetch=0,
            grid=(BH, N // tN),
            in_specs=[pl.BlockSpec((1, hd, tN), lambda b, n: (b, 0, n)),
                      pl.BlockSpec((1, hd, KK, tN), lambda b, n: (b, 0, 0, n)),
                      pl.BlockSpec((1, hd, KK, tN), lambda b, n: (b, 0, 0, n)),
                      pl.BlockSpec((hd, KK, tN), lambda b, n: (0, 0, n))],
            out_specs=pl.BlockSpec((1, hd, tN), lambda b, n: (b, 0, n))),
        compiler_params=pltpu.CompilerParams(
            dimension_semantics=("parallel", "parallel")),
    )(q.astype(jnp.float32), kw.astype(jnp.float32),
      vw.astype(jnp.float32), per.astype(jnp.float32))


# --------------------------------------------------------------------------
# Glue: im2col / unfold (plain-JAX), position map
# --------------------------------------------------------------------------
def im2col_patches(x, ksize, pad, mode):
    """x: (B, C, H, W) -> (B, C, ksize*ksize, H, W); matches torch.nn.Unfold order."""
    B, C, H, W = x.shape
    if pad > 0:
        x = jnp.pad(x, ((0, 0), (0, 0), (pad, pad), (pad, pad)), mode=mode)
    patches = [x[:, :, i:i + H, j:j + W]
               for i in range(ksize) for j in range(ksize)]
    return jnp.stack(patches, axis=2)


def position_map(h, w):
    loc_w = jnp.tile(jnp.linspace(-1.0, 1.0, w)[None, :], (h, 1))
    loc_h = jnp.tile(jnp.linspace(-1.0, 1.0, h)[:, None], (1, w))
    return jnp.stack([loc_h, loc_w], axis=0)                      # (2, h, w)


# --------------------------------------------------------------------------
# Parameter init (deterministic; mirrors the PyTorch module shapes)
# --------------------------------------------------------------------------
def _uniform(key, shape, fan_in):
    bound = 1.0 / jnp.sqrt(jnp.float32(fan_in))
    return jax.random.uniform(key, shape, jnp.float32, -bound, bound)


def init_conv(key, cout, cin, k):
    k1, k2 = jax.random.split(key)
    fan_in = cin * k * k
    return _uniform(k1, (cout, cin, k, k), fan_in), _uniform(k2, (cout,), fan_in)


def init_acmix(key, in_planes, out_planes, head=4, kernel_conv=3):
    keys = jax.random.split(key, 5)
    hd = out_planes // head
    params = {
        "conv1": init_conv(keys[0], out_planes, in_planes, 1),
        "conv2": init_conv(keys[1], out_planes, in_planes, 1),
        "conv3": init_conv(keys[2], out_planes, in_planes, 1),
        "conv_p": init_conv(keys[3], hd, 2, 1),
        # ACmix fc: Conv2d(3*head, kernel_conv**2, 1, bias=False)
        "fc": (_uniform(keys[4], (kernel_conv ** 2, 3 * head, 1, 1), 3 * head), None),
        "rate1": jnp.float32(0.5),     # init_rate_half
        "rate2": jnp.float32(0.5),
    }
    # dep_conv reset_parameters: identity "shift" kernels, zero bias
    kk = kernel_conv * kernel_conv
    shift = jnp.zeros((kk, kernel_conv, kernel_conv), jnp.float32)
    for i in range(kk):
        shift = shift.at[i, i // kernel_conv, i % kernel_conv].set(1.0)
    w_dep = jnp.tile(shift[None], (out_planes, 1, 1, 1))          # (out,9,3,3)
    params["dep_conv"] = (w_dep, jnp.zeros((out_planes,), jnp.float32))
    return params


def init_dmodule(key, d_model, kernel_size=3):
    kp, kc = jax.random.split(key)
    kp1, kp2 = jax.random.split(kp)
    kc1, kc2 = jax.random.split(kc)
    return {
        "pos": {"cnn": init_conv(kp1, d_model, d_model, kernel_size),
                "acmix": init_acmix(kp2, d_model, d_model)},
        "chan": {"cnn": init_conv(kc1, d_model, d_model, kernel_size),
                 "acmix": init_acmix(kc2, d_model, d_model)},
    }


# --------------------------------------------------------------------------
# ACmix forward on NHWC rows (head=4, kernel_att=7, kernel_conv=3, stride=1)
# --------------------------------------------------------------------------
def acmix_forward_rows(y_rows, params, b, h, w, head=4, kernel_att=7, kernel_conv=3):
    c = y_rows.shape[1]
    out_planes = c
    assert out_planes % head == 0
    hd = out_planes // head
    assert out_planes % hd == 0            # grouped dep_conv requirement
    N = h * w
    KK = kernel_att * kernel_att
    pad_att = (kernel_att - 1) // 2        # dilation=1 -> 3
    kc = kernel_conv
    scaling = float(hd) ** -0.5

    # ---- fused QKV (+ folded fc, + folded q-scaling) weight ----
    w_q, b_q = params["conv1"]
    w_k, b_k = params["conv2"]
    w_v, b_v = params["conv3"]
    w_fc, _ = params["fc"]
    wq2, wk2, wv2 = w_q[:, :, 0, 0], w_k[:, :, 0, 0], w_v[:, :, 0, 0]     # (C, C)
    w_sel = jnp.concatenate([wq2.reshape(head, hd, c),
                             wk2.reshape(head, hd, c),
                             wv2.reshape(head, hd, c)], axis=0)           # (3h, hd, C)
    b_sel = jnp.concatenate([b_q.reshape(head, hd),
                             b_k.reshape(head, hd),
                             b_v.reshape(head, hd)], axis=0)              # (3h, hd)
    wfc2 = w_fc.reshape(kc * kc, 3 * head)                                # (9, 3h)
    w_f = jnp.einsum("ks,sdc->dkc", wfc2, w_sel)                          # (hd, 9, C)
    w_f = w_f.transpose(2, 0, 1).reshape(c, hd * kc * kc)                 # (C, hd*9)
    b_f = jnp.einsum("ks,sd->dk", wfc2, b_sel).reshape(hd * kc * kc)

    w_comb = jnp.concatenate([wq2.T * scaling, wk2.T, wv2.T, w_f], axis=1)
    b_comb = jnp.concatenate([b_q * scaling, b_k, b_v, b_f], axis=0)

    qkvf = pallas_matmul(y_rows, w_comb) + b_comb[None, :]    # (B*N, 3C + hd*9)
    q_rows = qkvf[:, :c]                                      # already q * scaling
    k_rows = qkvf[:, c:2 * c]
    v_rows = qkvf[:, 2 * c:3 * c]
    f_rows = qkvf[:, 3 * c:]                                  # fc output, (d, k2) order

    # ---- attention branch ----
    def rows_to_heads(t):     # (B*N, C) -> (B*head, hd, h, w)
        return (t.reshape(b, h, w, head, hd)
                 .transpose(0, 3, 4, 1, 2)
                 .reshape(b * head, hd, h, w))

    q_att = rows_to_heads(q_rows)
    k_att = rows_to_heads(k_rows)
    v_att = rows_to_heads(v_rows)

    # 49-tap reflect windows, kept with N last (lane dim) -- no transposes.
    kw = im2col_patches(k_att, kernel_att, pad_att, "reflect").reshape(
        b * head, hd, KK, N)
    vw = im2col_patches(v_att, kernel_att, pad_att, "reflect").reshape(
        b * head, hd, KK, N)

    # pe = conv_p(position(h,w)) ; K=2 so tiny jnp einsum (avoid padded matmul).
    loc = position_map(h, w)
    w_p, b_p = params["conv_p"]
    pe = jnp.einsum("dc,chw->dhw", w_p[:, :, 0, 0], loc) + b_p[:, None, None]
    rpe = im2col_patches(pe[None], kernel_att, pad_att, "reflect")[0].reshape(
        hd, KK, N)
    per = pe.reshape(hd, 1, N) - rpe                          # (hd, KK, N), shared

    out_att = pallas_window_attention(q_att.reshape(b * head, hd, N), kw, vw, per)
    out_att = out_att.reshape(b, out_planes, h, w)

    # ---- conv branch: grouped dep_conv as a batched per-group matmul ----
    f_nhwc = f_rows.reshape(b, h, w, hd, kc * kc)             # channels = (d, k2)
    fp = jnp.pad(f_nhwc, ((0, 0), (1, 1), (1, 1), (0, 0), (0, 0)))
    taps = [fp[:, dy:dy + h, dx:dx + w] for dy in range(kc) for dx in range(kc)]
    cols = jnp.stack(taps, axis=-1)                           # (b,h,w,hd,9k2,9tap)
    cols = cols.transpose(3, 0, 1, 2, 4, 5).reshape(hd, b * N, kc * kc * kc * kc)

    w_dep, b_dep = params["dep_conv"]                         # (C, 9, 3, 3), (C,)
    wg = (w_dep.reshape(hd, head, kc * kc, kc * kc)           # (g, j, k2, tap)
               .transpose(0, 2, 3, 1)                         # (g, k2, tap, j)
               .reshape(hd, kc * kc * kc * kc, head))
    out_g = pallas_batched_matmul(cols, wg)                   # (hd, b*N, head)
    out_g = out_g + b_dep.reshape(hd, 1, head)
    out_conv = (out_g.reshape(hd, b, h, w, head)
                     .transpose(1, 0, 4, 2, 3)
                     .reshape(b, out_planes, h, w))

    return params["rate1"] * out_att + params["rate2"] * out_conv


# --------------------------------------------------------------------------
# DModule forward
# --------------------------------------------------------------------------
def dmodule_forward(x, params):
    bs, c, h, w = x.shape
    N = h * w
    x_nhwc = x.transpose(0, 2, 3, 1)                          # (b, h, w, c)

    # Fused stem: both 3x3 "cnn" convs (pos + chan) share one im2col + one matmul.
    wp_cnn, bp_cnn = params["pos"]["cnn"]
    wc_cnn, bc_cnn = params["chan"]["cnn"]
    k = wp_cnn.shape[-1]
    pad = (k - 1) // 2
    xp = jnp.pad(x_nhwc, ((0, 0), (pad, pad), (pad, pad), (0, 0)))
    taps = [xp[:, dy:dy + h, dx:dx + w] for dy in range(k) for dx in range(k)]
    cols = jnp.stack(taps, axis=3).reshape(bs * N, k * k * c)  # row idx = tap*C + cin

    def wmat(wt):   # (Cout, Cin, k, k) -> (k*k*Cin, Cout)
        return wt.transpose(2, 3, 1, 0).reshape(k * k * c, -1)

    w_stem = jnp.concatenate([wmat(wp_cnn), wmat(wc_cnn)], axis=1)   # (k*k*C, 2C)
    b_stem = jnp.concatenate([bp_cnn, bc_cnn], axis=0)
    y = pallas_matmul(cols, w_stem) + b_stem[None, :]                # (b*N, 2C)
    yp_rows, yc_rows = y[:, :c], y[:, c:]

    # PositionAttentionModule: flatten(2).permute(0,2,1) then DModule permutes back;
    # ChannelAttentionModule: flatten(2) then viewed back -> net identity reshapes,
    # so we add the two ACmix NCHW outputs directly.
    p_out = acmix_forward_rows(yp_rows, params["pos"]["acmix"], bs, h, w)
    c_out = acmix_forward_rows(yc_rows, params["chan"]["acmix"], bs, h, w)
    return p_out + c_out


if __name__ == "__main__":
    key = jax.random.PRNGKey(0)
    kx, kparam = jax.random.split(key)
    # small shapes consistent with DModule (d_model divisible by ACmix head=4,
    # spatial >= 4 so the 7x7 reflect window is valid)
    B, C, H, W = 2, 32, 8, 8
    x = jax.random.normal(kx, (B, C, H, W), jnp.float32)
    params = init_dmodule(kparam, C)
    out = jax.jit(dmodule_forward)(x, params)
    out = jax.block_until_ready(out)
    assert out.shape == (B, C, H, W)
    assert bool(jnp.all(jnp.isfinite(out)))
    print("KERNEL_OK")
</pallas_src>

<mosaic_0001>
module attributes {stable_mosaic.version = 11 : i64} {
  func.func @_matmul_kernel(%arg0: i32, %arg1: i32, %arg2: i32, %arg3: memref<128x384xbf16, #tpu.memory_space<vmem>>, %arg4: memref<384x128xbf16, #tpu.memory_space<vmem>>, %arg5: memref<128x128xf32, #tpu.memory_space<vmem>>, %arg6: memref<128x128xf32, #tpu.memory_space<vmem>>) attributes {dimension_semantics = [#tpu.dimension_semantics<parallel>, #tpu.dimension_semantics<parallel>, #tpu.dimension_semantics<arbitrary>], iteration_bounds = array<i64: 1, 1, 1>, scalar_prefetch = 0 : i64, scratch_operands = 1 : i64, tpu.core_type = #tpu.core_type<tc>, window_params = [{transform_indices = @transform_0, window_bounds = array<i64: 128, 384>}, {transform_indices = @transform_1, window_bounds = array<i64: 384, 128>}, {transform_indices = @transform_2, window_bounds = array<i64: 128, 128>}]} {
    %c0_i32 = arith.constant 0 : i32
    %0 = arith.cmpi eq, %arg2, %c0_i32 : i32
    %1 = arith.extui %0 : i1 to i32
    %c0_i32_0 = arith.constant 0 : i32
    %2 = arith.cmpi ne, %1, %c0_i32_0 : i32
    scf.if %2 {
      %cst_10 = arith.constant 0.000000e+00 : f32
      %12 = vector.broadcast %cst_10 : f32 to vector<128x128xf32>
      %c0_11 = arith.constant 0 : index
      %c0_12 = arith.constant 0 : index
      %13 = vector.load %arg6[%c0_11, %c0_12] : memref<128x128xf32, #tpu.memory_space<vmem>>, vector<128x128xf32>
      tpu.vector_store %arg6[%c0_11, %c0_12], %12 {strides = array<i32>} : memref<128x128xf32, #tpu.memory_space<vmem>>, vector<128x128xf32>,
    } else {
    }
    %c0 = arith.constant 0 : index
    %c0_1 = arith.constant 0 : index
    %3 = vector.load %arg6[%c0, %c0_1] : memref<128x128xf32, #tpu.memory_space<vmem>>, vector<128x128xf32>
    %c0_2 = arith.constant 0 : index
    %c0_3 = arith.constant 0 : index
    %4 = vector.load %arg3[%c0_2, %c0_3] : memref<128x384xbf16, #tpu.memory_space<vmem>>, vector<128x384xbf16>
    %c0_4 = arith.constant 0 : index
    %c0_5 = arith.constant 0 : index
    %5 = vector.load %arg4[%c0_4, %c0_5] : memref<384x128xbf16, #tpu.memory_space<vmem>>, vector<384x128xbf16>
    %cst = arith.constant dense<0.000000e+00> : vector<128x128xf32>
    %6 = tpu.matmul %4, %5, %cst {dimension_numbers = #tpu.dot_dimension_numbers<[1], [0], [0], [1], [0, 0, 1, 1], [], []>} : vector<128x384xbf16>, vector<384x128xbf16>, vector<128x128xf32> -> vector<128x128xf32>
    %7 = arith.addf %3, %6 : vector<128x128xf32>
    %c0_6 = arith.constant 0 : index
    %c0_7 = arith.constant 0 : index
    %8 = vector.load %arg6[%c0_6, %c0_7] : memref<128x128xf32, #tpu.memory_space<vmem>>, vector<128x128xf32>
    tpu.vector_store %arg6[%c0_6, %c0_7], %7 {strides = array<i32>} : memref<128x128xf32, #tpu.memory_space<vmem>>, vector<128x128xf32>,
    %c0_i32_8 = arith.constant 0 : i32
    %9 = arith.cmpi eq, %arg2, %c0_i32_8 : i32
    %10 = arith.extui %9 : i1 to i32
    %c0_i32_9 = arith.constant 0 : i32
    %11 = arith.cmpi ne, %10, %c0_i32_9 : i32
    scf.if %11 {
      %c0_10 = arith.constant 0 : index
      %c0_11 = arith.constant 0 : index
      %12 = vector.load %arg6[%c0_10, %c0_11] : memref<128x128xf32, #tpu.memory_space<vmem>>, vector<128x128xf32>
      %c0_12 = arith.constant 0 : index
      %c0_13 = arith.constant 0 : index
      %13 = vector.load %arg5[%c0_12, %c0_13] : memref<128x128xf32, #tpu.memory_space<vmem>>, vector<128x128xf32>
      tpu.vector_store %arg5[%c0_12, %c0_13], %12 {strides = array<i32>} : memref<128x128xf32, #tpu.memory_space<vmem>>, vector<128x128xf32>,
    } else {
    }
    return
  }
  func.func @transform_0(%arg0: i32, %arg1: i32, %arg2: i32) -> (i32, i32) {
    %c0_i32 = arith.constant 0 : i32
    return %arg0, %arg2 : i32, i32
  }
  func.func @transform_1(%arg0: i32, %arg1: i32, %arg2: i32) -> (i32, i32) {
    %c0_i32 = arith.constant 0 : i32
    return %arg2, %arg1 : i32, i32
  }
  func.func @transform_2(%arg0: i32, %arg1: i32, %arg2: i32) -> (i32, i32) {
    %c0_i32 = arith.constant 0 : i32
    return %arg0, %arg1 : i32, i32
  }
}

module attributes {stable_mosaic.version = 11 : i64} {
  func.func @_matmul_kernel(%arg0: i32, %arg1: i32, %arg2: i32, %arg3: memref<128x128xbf16, #tpu.memory_space<vmem>>, %arg4: memref<128x256xbf16, #tpu.memory_space<vmem>>, %arg5: memref<128x256xf32, #tpu.memory_space<vmem>>, %arg6: memref<128x256xf32, #tpu.memory_space<vmem>>) attributes {dimension_semantics = [#tpu.dimension_semantics<parallel>, #tpu.dimension_semantics<parallel>, #tpu.dimension_semantics<arbitrary>], iteration_bounds = array<i64: 1, 1, 1>, scalar_prefetch = 0 : i64, scratch_operands = 1 : i64, tpu.core_type = #tpu.core_type<tc>, window_params = [{transform_indices = @transform_0, window_bounds = array<i64: 128, 128>}, {transform_indices = @transform_1, window_bounds = array<i64: 128, 256>}, {transform_indices = @transform_2, window_bounds = array<i64: 128, 256>}]} {
    %c0_i32 = arith.constant 0 : i32
    %0 = arith.cmpi eq, %arg2, %c0_i32 : i32
    %1 = arith.extui %0 : i1 to i32
    %c0_i32_0 = arith.constant 0 : i32
    %2 = arith.cmpi ne, %1, %c0_i32_0 : i32
    scf.if %2 {
      %cst_10 = arith.constant 0.000000e+00 : f32
      %12 = vector.broadcast %cst_10 : f32 to vector<128x256xf32>
      %c0_11 = arith.constant 0 : index
      %c0_12 = arith.constant 0 : index
      %13 = vector.load %arg6[%c0_11, %c0_12] : memref<128x256xf32, #tpu.memory_space<vmem>>, vector<128x256xf32>
      tpu.vector_store %arg6[%c0_11, %c0_12], %12 {strides = array<i32>} : memref<128x256xf32, #tpu.memory_space<vmem>>, vector<128x256xf32>,
    } else {
    }
    %c0 = arith.constant 0 : index
    %c0_1 = arith.constant 0 : index
    %3 = vector.load %arg6[%c0, %c0_1] : memref<128x256xf32, #tpu.memory_space<vmem>>, vector<128x256xf32>
    %c0_2 = arith.constant 0 : index
    %c0_3 = arith.constant 0 : index
    %4 = vector.load %arg3[%c0_2, %c0_3] : memref<128x128xbf16, #tpu.memory_space<vmem>>, vector<128x128xbf16>
    %c0_4 = arith.constant 0 : index
    %c0_5 = arith.constant 0 : index
    %5 = vector.load %arg4[%c0_4, %c0_5] : memref<128x256xbf16, #tpu.memory_space<vmem>>, vector<128x256xbf16>
    %cst = arith.constant dense<0.000000e+00> : vector<128x256xf32>
    %6 = tpu.matmul %4, %5, %cst {dimension_numbers = #tpu.dot_dimension_numbers<[1], [0], [0], [1], [0, 0, 1, 1], [], []>} : vector<128x128xbf16>, vector<128x256xbf16>, vector<128x256xf32> -> vector<128x256xf32>
    %7 = arith.addf %3, %6 : vector<128x256xf32>
    %c0_6 = arith.constant 0 : index
    %c0_7 = arith.constant 0 : index
    %8 = vector.load %arg6[%c0_6, %c0_7] : memref<128x256xf32, #tpu.memory_space<vmem>>, vector<128x256xf32>
    tpu.vector_store %arg6[%c0_6, %c0_7], %7 {strides = array<i32>} : memref<128x256xf32, #tpu.memory_space<vmem>>, vector<128x256xf32>,
    %c0_i32_8 = arith.constant 0 : i32
    %9 = arith.cmpi eq, %arg2, %c0_i32_8 : i32
    %10 = arith.extui %9 : i1 to i32
    %c0_i32_9 = arith.constant 0 : i32
    %11 = arith.cmpi ne, %10, %c0_i32_9 : i32
    scf.if %11 {
      %c0_10 = arith.constant 0 : index
      %c0_11 = arith.constant 0 : index
      %12 = vector.load %arg6[%c0_10, %c0_11] : memref<128x256xf32, #tpu.memory_space<vmem>>, vector<128x256xf32>
      %c0_12 = arith.constant 0 : index
      %c0_13 = arith.constant 0 : index
      %13 = vector.load %arg5[%c0_12, %c0_13] : memref<128x256xf32, #tpu.memory_space<vmem>>, vector<128x256xf32>
      tpu.vector_store %arg5[%c0_12, %c0_13], %12 {strides = array<i32>} : memref<128x256xf32, #tpu.memory_space<vmem>>, vector<128x256xf32>,
    } else {
    }
    return
  }
  func.func @transform_0(%arg0: i32, %arg1: i32, %arg2: i32) -> (i32, i32) {
    %c0_i32 = arith.constant 0 : i32
    return %arg0, %arg2 : i32, i32
  }
  func.func @transform_1(%arg0: i32, %arg1: i32, %arg2: i32) -> (i32, i32) {
    %c0_i32 = arith.constant 0 : i32
    return %arg2, %arg1 : i32, i32
  }
  func.func @transform_2(%arg0: i32, %arg1: i32, %arg2: i32) -> (i32, i32) {
    %c0_i32 = arith.constant 0 : i32
    return %arg0, %arg1 : i32, i32
  }
}

module attributes {stable_mosaic.version = 11 : i64} {
  func.func @_bmm_kernel(%arg0: i32, %arg1: i32, %arg2: memref<1x128x81xbf16, #tpu.memory_space<vmem>>, %arg3: memref<1x81x4xbf16, #tpu.memory_space<vmem>>, %arg4: memref<1x128x4xf32, #tpu.memory_space<vmem>>) attributes {dimension_semantics = [#tpu.dimension_semantics<parallel>, #tpu.dimension_semantics<parallel>], iteration_bounds = array<i64: 8, 1>, scalar_prefetch = 0 : i64, scratch_operands = 0 : i64, tpu.core_type = #tpu.core_type<tc>, window_params = [{transform_indices = @transform_0, window_bounds = array<i64: 1, 128, 81>}, {transform_indices = @transform_1, window_bounds = array<i64: 1, 81, 4>}, {transform_indices = @transform_2, window_bounds = array<i64: 1, 128, 4>}]} {
    %c0 = arith.constant 0 : index
    %c0_0 = arith.constant 0 : index
    %c0_1 = arith.constant 0 : index
    %0 = vector.load %arg2[%c0, %c0_0, %c0_1] : memref<1x128x81xbf16, #tpu.memory_space<vmem>>, vector<1x128x81xbf16>
    %1 = vector.shape_cast %0 : vector<1x128x81xbf16> to vector<128x81xbf16>
    %c0_2 = arith.constant 0 : index
    %c0_3 = arith.constant 0 : index
    %c0_4 = arith.constant 0 : index
    %2 = vector.load %arg3[%c0_2, %c0_3, %c0_4] : memref<1x81x4xbf16, #tpu.memory_space<vmem>>, vector<1x81x4xbf16>
    %3 = vector.shape_cast %2 : vector<1x81x4xbf16> to vector<81x4xbf16>
    %cst = arith.constant dense<0.000000e+00> : vector<128x4xf32>
    %4 = tpu.matmul %1, %3, %cst {dimension_numbers = #tpu.dot_dimension_numbers<[1], [0], [0], [1], [0, 0, 1, 1], [], []>} : vector<128x81xbf16>, vector<81x4xbf16>, vector<128x4xf32> -> vector<128x4xf32>
    %c0_5 = arith.constant 0 : index
    %c0_6 = arith.constant 0 : index
    %c0_7 = arith.constant 0 : index
    %5 = vector.load %arg4[%c0_5, %c0_6, %c0_7] : memref<1x128x4xf32, #tpu.memory_space<vmem>>, vector<1x128x4xf32>
    %6 = vector.shape_cast %5 : vector<1x128x4xf32> to vector<128x4xf32>
    %7 = vector.shape_cast %4 : vector<128x4xf32> to vector<1x128x4xf32>
    tpu.vector_store %arg4[%c0_5, %c0_6, %c0_7], %7 {strides = array<i32>} : memref<1x128x4xf32, #tpu.memory_space<vmem>>, vector<1x128x4xf32>,
    return
  }
  func.func @transform_0(%arg0: i32, %arg1: i32) -> (i32, i32, i32) {
    %c0_i32 = arith.constant 0 : i32
    %c0_i32_0 = arith.constant 0 : i32
    return %arg0, %arg1, %c0_i32 : i32, i32, i32
  }
  func.func @transform_1(%arg0: i32, %arg1: i32) -> (i32, i32, i32) {
    %c0_i32 = arith.constant 0 : i32
    %c0_i32_0 = arith.constant 0 : i32
    %c0_i32_1 = arith.constant 0 : i32
    return %arg0, %c0_i32, %c0_i32_0 : i32, i32, i32
  }
  func.func @transform_2(%arg0: i32, %arg1: i32) -> (i32, i32, i32) {
    %c0_i32 = arith.constant 0 : i32
    %c0_i32_0 = arith.constant 0 : i32
    return %arg0, %arg1, %c0_i32 : i32, i32, i32
  }
}

module attributes {stable_mosaic.version = 11 : i64} {
  func.func @_window_attn_kernel(%arg0: i32, %arg1: i32, %arg2: memref<1x8x64xf32, #tpu.memory_space<vmem>>, %arg3: memref<1x8x49x64xf32, #tpu.memory_space<vmem>>, %arg4: memref<1x8x49x64xf32, #tpu.memory_space<vmem>>, %arg5: memref<8x49x64xf32, #tpu.memory_space<vmem>>, %arg6: memref<1x8x64xf32, #tpu.memory_space<vmem>>) attributes {dimension_semantics = [#tpu.dimension_semantics<parallel>, #tpu.dimension_semantics<parallel>], iteration_bounds = array<i64: 8, 1>, scalar_prefetch = 0 : i64, scratch_operands = 0 : i64, tpu.core_type = #tpu.core_type<tc>, window_params = [{transform_indices = @transform_0, window_bounds = array<i64: 1, 8, 64>}, {transform_indices = @transform_1, window_bounds = array<i64: 1, 8, 49, 64>}, {transform_indices = @transform_2, window_bounds = array<i64: 1, 8, 49, 64>}, {transform_indices = @transform_3, window_bounds = array<i64: 8, 49, 64>}, {transform_indices = @transform_4, window_bounds = array<i64: 1, 8, 64>}]} {
    %c0 = arith.constant 0 : index
    %c0_0 = arith.constant 0 : index
    %c0_1 = arith.constant 0 : index
    %0 = vector.load %arg2[%c0, %c0_0, %c0_1] : memref<1x8x64xf32, #tpu.memory_space<vmem>>, vector<1x8x64xf32>
    %1 = vector.shape_cast %0 : vector<1x8x64xf32> to vector<8x64xf32>
    %c0_2 = arith.constant 0 : index
    %c0_3 = arith.constant 0 : index
    %c0_4 = arith.constant 0 : index
    %c0_5 = arith.constant 0 : index
    %2 = vector.load %arg3[%c0_2, %c0_3, %c0_4, %c0_5] : memref<1x8x49x64xf32, #tpu.memory_space<vmem>>, vector<1x8x49x64xf32>
    %3 = vector.shape_cast %2 : vector<1x8x49x64xf32> to vector<8x49x64xf32>
    %c0_6 = arith.constant 0 : index
    %c0_7 = arith.constant 0 : index
    %c0_8 = arith.constant 0 : index
    %c0_9 = arith.constant 0 : index
    %4 = vector.load %arg4[%c0_6, %c0_7, %c0_8, %c0_9] : memref<1x8x49x64xf32, #tpu.memory_space<vmem>>, vector<1x8x49x64xf32>
    %5 = vector.shape_cast %4 : vector<1x8x49x64xf32> to vector<8x49x64xf32>
    %c0_10 = arith.constant 0 : index
    %c0_11 = arith.constant 0 : index
    %c0_12 = arith.constant 0 : index
    %6 = vector.load %arg5[%c0_10, %c0_11, %c0_12] : memref<8x49x64xf32, #tpu.memory_space<vmem>>, vector<8x49x64xf32>
    %7 = arith.addf %3, %6 : vector<8x49x64xf32>
    %8 = vector.shape_cast %1 : vector<8x64xf32> to vector<8x1x64xf32>
    %9 = vector.broadcast %8 : vector<8x1x64xf32> to vector<8x49x64xf32>
    %10 = arith.mulf %9, %7 : vector<8x49x64xf32>
    %cst = arith.constant dense<0.000000e+00> : vector<49x64xf32>
    %11 = vector.multi_reduction <add>, %10, %cst [0] : vector<8x49x64xf32> to vector<49x64xf32>
    %cst_13 = arith.constant dense<0xFF800000> : vector<64xf32>
    %12 = vector.multi_reduction <maximumf>, %11, %cst_13 [0] : vector<49x64xf32> to vector<64xf32>
    %13 = vector.shape_cast %12 : vector<64xf32> to vector<1x64xf32>
    %14 = vector.broadcast %13 : vector<1x64xf32> to vector<49x64xf32>
    %15 = arith.subf %11, %14 : vector<49x64xf32>
    %16 = math.exp %15 : vector<49x64xf32>
    %cst_14 = arith.constant dense<0.000000e+00> : vector<64xf32>
    %17 = vector.multi_reduction <add>, %16, %cst_14 [0] : vector<49x64xf32> to vector<64xf32>
    %18 = vector.shape_cast %17 : vector<64xf32> to vector<1x64xf32>
    %19 = tpu.reciprocal %18 {approx = true} : vector<1x64xf32> -> vector<1x64xf32>
    %20 = vector.broadcast %19 : vector<1x64xf32> to vector<49x64xf32>
    %21 = arith.mulf %16, %20 : vector<49x64xf32>
    %22 = vector.shape_cast %21 : vector<49x64xf32> to vector<1x49x64xf32>
    %23 = vector.broadcast %22 : vector<1x49x64xf32> to vector<8x49x64xf32>
    %24 = arith.mulf %23, %5 : vector<8x49x64xf32>
    %cst_15 = arith.constant dense<0.000000e+00> : vector<8x64xf32>
    %25 = vector.multi_reduction <add>, %24, %cst_15 [1] : vector<8x49x64xf32> to vector<8x64xf32>
    %c0_16 = arith.constant 0 : index
    %c0_17 = arith.constant 0 : index
    %c0_18 = arith.constant 0 : index
    %26 = vector.load %arg6[%c0_16, %c0_17, %c0_18] : memref<1x8x64xf32, #tpu.memory_space<vmem>>, vector<1x8x64xf32>
    %27 = vector.shape_cast %26 : vector<1x8x64xf32> to vector<8x64xf32>
    %28 = vector.shape_cast %25 : vector<8x64xf32> to vector<1x8x64xf32>
    tpu.vector_store %arg6[%c0_16, %c0_17, %c0_18], %28 {strides = array<i32>} : memref<1x8x64xf32, #tpu.memory_space<vmem>>, vector<1x8x64xf32>,
    return
  }
  func.func @transform_0(%arg0: i32, %arg1: i32) -> (i32, i32, i32) {
    %c0_i32 = arith.constant 0 : i32
    %c0_i32_0 = arith.constant 0 : i32
    return %arg0, %c0_i32, %arg1 : i32, i32, i32
  }
  func.func @transform_1(%arg0: i32, %arg1: i32) -> (i32, i32, i32, i32) {
    %c0_i32 = arith.constant 0 : i32
    %c0_i32_0 = arith.constant 0 : i32
    %c0_i32_1 = arith.constant 0 : i32
    return %arg0, %c0_i32, %c0_i32_0, %arg1 : i32, i32, i32, i32
  }
  func.func @transform_2(%arg0: i32, %arg1: i32) -> (i32, i32, i32, i32) {
    %c0_i32 = arith.constant 0 : i32
    %c0_i32_0 = arith.constant 0 : i32
    %c0_i32_1 = arith.constant 0 : i32
    return %arg0, %c0_i32, %c0_i32_0, %arg1 : i32, i32, i32, i32
  }
  func.func @transform_3(%arg0: i32, %arg1: i32) -> (i32, i32, i32) {
    %c0_i32 = arith.constant 0 : i32
    %c0_i32_0 = arith.constant 0 : i32
    %c0_i32_1 = arith.constant 0 : i32
    return %c0_i32, %c0_i32_0, %arg1 : i32, i32, i32
  }
  func.func @transform_4(%arg0: i32, %arg1: i32) -> (i32, i32, i32) {
    %c0_i32 = arith.constant 0 : i32
    %c0_i32_0 = arith.constant 0 : i32
    return %arg0, %c0_i32, %arg1 : i32, i32, i32
  }
}

</mosaic_0001>

<llo_original>
// kernel: dmodule_forward.7
$region0: #{dmodule_forward.7}
  #allocation0 [shape = 'u32[]', space=smem, size = 0x4, offset = 0x4, fixed_abs, tag = 'smem constant byte address 0x4 - core index']
  #allocation1 [shape = 'u32[144,128]{1,0:T(1,128)}', space=vmem, size = 0x12000, scoped, tag = 'internal scratch']
  #allocation2 [shape = 'f32[128,128]{1,0:T(8,128)}', space=vmem, size = 0x10000, scoped, tag = 'scratch operand']
  %s0 = inlined_call_operand.vmem [shape: bf16[128,384], index: 0, kind: input, shape index: {}]
  %s1 = inlined_call_operand.vmem [shape: bf16[384,128], index: 1, kind: input, shape index: {}]
  %s2 = inlined_call_operand.vmem [shape: f32[128,128], index: 2, kind: output, shape index: {}]
  %s3 = sld [smem:[#allocation0]]
  $region26: #{dmodule_forward.7} parent=0
    _
  %s5 = ssub.s32 1, %s3
  %s6 = scalar_select 0, %s5, %s3
  // Predicated region
  $region2: #{dmodule_forward.7} parent=0 // pred_check
    _
  $region3: #{dmodule_forward.7} parent=0 // pred_check_branch
    %8 = sbr.rel (0) target = $region5
  $region4: #{dmodule_forward.7} parent=0 // pred_region
    _
  $region5: #{dmodule_forward.7} parent=0 // pred_fallthru
    _
  // Predicated region
  $region6: #{dmodule_forward.7} parent=0 // pred_check
    _
  $region7: #{dmodule_forward.7} parent=0 // pred_check_branch
    %10 = sbr.rel (0) target = $region9
  $region8: #{dmodule_forward.7} parent=0 // pred_region
    _
  $region9: #{dmodule_forward.7} parent=0 // pred_fallthru
    _
  %p12 = scmp.eq.s32.totalorder 0, 0
  // Predicated region
  $region10: #{dmodule_forward.7} parent=0 // pred_check
    %p13 = pneg %p12
  $region11: #{dmodule_forward.7} parent=0 // pred_check_branch
    %15 = sbr.rel (%p13) target = $region13
  $region12: #{dmodule_forward.7} parent=0 // pred_region
    %16 = vst [vmem:[#allocation2] sm:$0xff] 0.0
    %17 = vst [vmem:[#allocation2 + $0x8] sm:$0xff] 0.0
    %18 = vst [vmem:[#allocation2 + $0x10] sm:$0xff] 0.0
    %19 = vst [vmem:[#allocation2 + $0x18] sm:$0xff] 0.0
    %20 = vst [vmem:[#allocation2 + $0x20] sm:$0xff] 0.0
    %21 = vst [vmem:[#allocation2 + $0x28] sm:$0xff] 0.0
    %22 = vst [vmem:[#allocation2 + $0x30] sm:$0xff] 0.0
    %23 = vst [vmem:[#allocation2 + $0x38] sm:$0xff] 0.0
    %24 = vst [vmem:[#allocation2 + $0x40] sm:$0xff] 0.0
    %25 = vst [vmem:[#allocation2 + $0x48] sm:$0xff] 0.0
    %26 = vst [vmem:[#allocation2 + $0x50] sm:$0xff] 0.0
    %27 = vst [vmem:[#allocation2 + $0x58] sm:$0xff] 0.0
    %28 = vst [vmem:[#allocation2 + $0x60] sm:$0xff] 0.0
    %29 = vst [vmem:[#allocation2 + $0x68] sm:$0xff] 0.0
    %30 = vst [vmem:[#allocation2 + $0x70] sm:$0xff] 0.0
    %31 = vst [vmem:[#allocation2 + $0x78] sm:$0xff] 0.0
  $region13: #{dmodule_forward.7} parent=0 // pred_fallthru
    _
  %v32 = vld [vmem:[#allocation2] sm:$0xff]
  %v33 = vld [vmem:[#allocation2 + $0x8] sm:$0xff]
  %v34 = vld [vmem:[#allocation2 + $0x10] sm:$0xff]
  %v35 = vld [vmem:[#allocation2 + $0x18] sm:$0xff]
  %v36 = vld [vmem:[#allocation2 + $0x20] sm:$0xff]
  %v37 = vld [vmem:[#allocation2 + $0x28] sm:$0xff]
  %v38 = vld [vmem:[#allocation2 + $0x30] sm:$0xff]
  %v39 = vld [vmem:[#allocation2 + $0x38] sm:$0xff]
  %v40 = vld [vmem:[#allocation2 + $0x40] sm:$0xff]
  %v41 = vld [vmem:[#allocation2 + $0x48] sm:$0xff]
  %v42 = vld [vmem:[#allocation2 + $0x50] sm:$0xff]
  %v43 = vld [vmem:[#allocation2 + $0x58] sm:$0xff]
  %v44 = vld [vmem:[#allocation2 + $0x60] sm:$0xff]
  %v45 = vld [vmem:[#allocation2 + $0x68] sm:$0xff]
  %v46 = vld [vmem:[#allocation2 + $0x70] sm:$0xff]
  %v47 = vld [vmem:[#allocation2 + $0x78] sm:$0xff]
  %v48 = vld [vmem:[%s0] sm:$0xff]
  %v49 = vld [vmem:[%s0 + $0x8] sm:$0xf]
  %v50 = vld [vmem:[%s0 + $0xc] sm:$0xff]
  %v51 = vld [vmem:[%s0 + $0x14] sm:$0xf]
  %v52 = vld [vmem:[%s0 + $0x18] sm:$0xff]
  %v53 = vld [vmem:[%s0 + $0x20] sm:$0xf]
  %v54 = vld [vmem:[%s0 + $0x24] sm:$0xff]
  %v55 = vld [vmem:[%s0 + $0x2c] sm:$0xf]
  %v56 = vld [vmem:[%s0 + $0x30] sm:$0xff]
  %v57 = vld [vmem:[%s0 + $0x38] sm:$0xf]
  %v58 = vld [vmem:[%s0 + $0x3c] sm:$0xff]
  %v59 = vld [vmem:[%s0 + $0x44] sm:$0xf]
  %v60 = vld [vmem:[%s0 + $0x48] sm:$0xff]
  %v61 = vld [vmem:[%s0 + $0x50] sm:$0xf]
  %v62 = vld [vmem:[%s0 + $0x54] sm:$0xff]
  %v63 = vld [vmem:[%s0 + $0x5c] sm:$0xf]
  %v64 = vld [vmem:[%s0 + $0x60] sm:$0xff]
  %v65 = vld [vmem:[%s0 + $0x68] sm:$0xf]
  %v66 = vld [vmem:[%s0 + $0x6c] sm:$0xff]
  %v67 = vld [vmem:[%s0 + $0x74] sm:$0xf]
  %v68 = vld [vmem:[%s0 + $0x78] sm:$0xff]
  %v69 = vld [vmem:[%s0 + $0x80] sm:$0xf]
  %v70 = vld [vmem:[%s0 + $0x84] sm:$0xff]
  %v71 = vld [vmem:[%s0 + $0x8c] sm:$0xf]
  %v72 = vld [vmem:[%s0 + $0x90] sm:$0xff]
  %v73 = vld [vmem:[%s0 + $0x98] sm:$0xf]
  %v74 = vld [vmem:[%s0 + $0x9c] sm:$0xff]
  %v75 = vld [vmem:[%s0 + $0xa4] sm:$0xf]
  %v76 = vld [vmem:[%s0 + $0xa8] sm:$0xff]
  %v77 = vld [vmem:[%s0 + $0xb0] sm:$0xf]
  %v78 = vld [vmem:[%s0 + $0xb4] sm:$0xff]
  %v79 = vld [vmem:[%s0 + $0xbc] sm:$0xf]
  %v80 = vld [vmem:[%s1] sm:$0xf]
  %v81 = vld [vmem:[%s1 + $0x4] sm:$0xf]
  %v82 = vld [vmem:[%s1 + $0x8] sm:$0xf]
  %v83 = vld [vmem:[%s1 + $0xc] sm:$0xf]
  %v84 = vld [vmem:[%s1 + $0x10] sm:$0xf]
  %v85 = vld [vmem:[%s1 + $0x14] sm:$0xf]
  %v86 = vld [vmem:[%s1 + $0x18] sm:$0xf]
  %v87 = vld [vmem:[%s1 + $0x1c] sm:$0xf]
  %v88 = vld [vmem:[%s1 + $0x20] sm:$0xf]
  %v89 = vld [vmem:[%s1 + $0x24] sm:$0xf]
  %v90 = vld [vmem:[%s1 + $0x28] sm:$0xf]
  %v91 = vld [vmem:[%s1 + $0x2c] sm:$0xf]
  %v92 = vld [vmem:[%s1 + $0x30] sm:$0xf]
  %v93 = vld [vmem:[%s1 + $0x34] sm:$0xf]
  %v94 = vld [vmem:[%s1 + $0x38] sm:$0xf]
  %v95 = vld [vmem:[%s1 + $0x3c] sm:$0xf]
  %v96 = vld [vmem:[%s1 + $0x40] sm:$0xf]
  %v97 = vld [vmem:[%s1 + $0x44] sm:$0xf]
  %v98 = vld [vmem:[%s1 + $0x48] sm:$0xf]
  %v99 = vld [vmem:[%s1 + $0x4c] sm:$0xf]
  %v100 = vld [vmem:[%s1 + $0x50] sm:$0xf]
  %v101 = vld [vmem:[%s1 + $0x54] sm:$0xf]
  %v102 = vld [vmem:[%s1 + $0x58] sm:$0xf]
  %v103 = vld [vmem:[%s1 + $0x5c] sm:$0xf]
  %v104 = vld [vmem:[%s1 + $0x60] sm:$0xf]
  %v105 = vld [vmem:[%s1 + $0x64] sm:$0xf]
  %v106 = vld [vmem:[%s1 + $0x68] sm:$0xf]
  %v107 = vld [vmem:[%s1 + $0x6c] sm:$0xf]
  %v108 = vld [vmem:[%s1 + $0x70] sm:$0xf]
  %v109 = vld [vmem:[%s1 + $0x74] sm:$0xf]
  %v110 = vld [vmem:[%s1 + $0x78] sm:$0xf]
  %v111 = vld [vmem:[%s1 + $0x7c] sm:$0xf]
  %v112 = vld [vmem:[%s1 + $0x80] sm:$0xf]
  %v113 = vld [vmem:[%s1 + $0x84] sm:$0xf]
  %v114 = vld [vmem:[%s1 + $0x88] sm:$0xf]
  %v115 = vld [vmem:[%s1 + $0x8c] sm:$0xf]
  %v116 = vld [vmem:[%s1 + $0x90] sm:$0xf]
  %v117 = vld [vmem:[%s1 + $0x94] sm:$0xf]
  %v118 = vld [vmem:[%s1 + $0x98] sm:$0xf]
  %v119 = vld [vmem:[%s1 + $0x9c] sm:$0xf]
  %v120 = vld [vmem:[%s1 + $0xa0] sm:$0xf]
  %v121 = vld [vmem:[%s1 + $0xa4] sm:$0xf]
  %v122 = vld [vmem:[%s1 + $0xa8] sm:$0xf]
  %v123 = vld [vmem:[%s1 + $0xac] sm:$0xf]
  %v124 = vld [vmem:[%s1 + $0xb0] sm:$0xf]
  %v125 = vld [vmem:[%s1 + $0xb4] sm:$0xf]
  %v126 = vld [vmem:[%s1 + $0xb8] sm:$0xf]
  %v127 = vld [vmem:[%s1 + $0xbc] sm:$0xf]
  %v160 = vunpack.c.l.b16 %v48
  %v161 = vunpack.c.h.b16 %v48
  %v162 = vunpack.c.l.b16 %v49
  %v163 = vunpack.c.l.b16 %v50
  %v164 = vunpack.c.h.b16 %v50
  %v165 = vunpack.c.l.b16 %v51
  %v166 = vunpack.c.l.b16 %v52
  %v167 = vunpack.c.h.b16 %v52
  %v168 = vunpack.c.l.b16 %v53
  %v169 = vunpack.c.l.b16 %v54
  %v170 = vunpack.c.h.b16 %v54
  %v171 = vunpack.c.l.b16 %v55
  %v172 = vunpack.c.l.b16 %v56
  %v173 = vunpack.c.h.b16 %v56
  %v174 = vunpack.c.l.b16 %v57
  %v175 = vunpack.c.l.b16 %v58
  %v176 = vunpack.c.h.b16 %v58
  %v177 = vunpack.c.l.b16 %v59
  %v178 = vunpack.c.l.b16 %v60
  %v179 = vunpack.c.h.b16 %v60
  %v180 = vunpack.c.l.b16 %v61
  %v181 = vunpack.c.l.b16 %v62
  %v182 = vunpack.c.h.b16 %v62
  %v183 = vunpack.c.l.b16 %v63
  %v184 = vunpack.c.l.b16 %v64
  %v185 = vunpack.c.h.b16 %v64
  %v186 = vunpack.c.l.b16 %v65
  %v187 = vunpack.c.l.b16 %v66
  %v188 = vunpack.c.h.b16 %v66
  %v189 = vunpack.c.l.b16 %v67
  %v190 = vunpack.c.l.b16 %v68
  %v191 = vunpack.c.h.b16 %v68
  %v192 = vunpack.c.l.b16 %v69
  %v193 = vunpack.c.l.b16 %v70
  %v194 = vunpack.c.h.b16 %v70
  %v195 = vunpack.c.l.b16 %v71
  %v196 = vunpack.c.l.b16 %v72
  %v197 = vunpack.c.h.b16 %v72
  %v198 = vunpack.c.l.b16 %v73
  %v199 = vunpack.c.l.b16 %v74
  %v200 = vunpack.c.h.b16 %v74
  %v201 = vunpack.c.l.b16 %v75
  %v202 = vunpack.c.l.b16 %v76
  %v203 = vunpack.c.h.b16 %v76
  %v204 = vunpack.c.l.b16 %v77
  %v205 = vunpack.c.l.b16 %v78
  %v206 = vunpack.c.h.b16 %v78
  %v207 = vunpack.c.l.b16 %v79
  %v208 = vpack.c.b16 %v163, %v160
  %v209 = vpack.c.b16 %v164, %v161
  %v210 = vpack.c.b16 %v165, %v162
  %v211 = vpack.c.b16 %v169, %v166
  %v212 = vpack.c.b16 %v170, %v167
  %v213 = vpack.c.b16 %v171, %v168
  %v214 = vpack.c.b16 %v175, %v172
  %v215 = vpack.c.b16 %v176, %v173
  %v216 = vpack.c.b16 %v177, %v174
  %v217 = vpack.c.b16 %v181, %v178
  %v218 = vpack.c.b16 %v182, %v179
  %v219 = vpack.c.b16 %v183, %v180
  %v220 = vpack.c.b16 %v187, %v184
  %v221 = vpack.c.b16 %v188, %v185
  %v222 = vpack.c.b16 %v189, %v186
  %v223 = vpack.c.b16 %v193, %v190
  %v224 = vpack.c.b16 %v194, %v191
  %v225 = vpack.c.b16 %v195, %v192
  %v226 = vpack.c.b16 %v199, %v196
  %v227 = vpack.c.b16 %v200, %v197
  %v228 = vpack.c.b16 %v201, %v198
  %v229 = vpack.c.b16 %v205, %v202
  %v230 = vpack.c.b16 %v206, %v203
  %v231 = vpack.c.b16 %v207, %v204
  %v304 = vunpack.c.l.b16 %v80
  %v305 = vunpack.c.l.b16 %v81
  %v306 = vunpack.c.l.b16 %v82
  %v307 = vunpack.c.l.b16 %v83
  %v308 = vunpack.c.l.b16 %v84
  %v309 = vunpack.c.l.b16 %v85
  %v310 = vunpack.c.l.b16 %v86
  %v311 = vunpack.c.l.b16 %v87
  %v312 = vunpack.c.l.b16 %v88
  %v313 = vunpack.c.l.b16 %v89
  %v314 = vunpack.c.l.b16 %v90
  %v315 = vunpack.c.l.b16 %v91
  %v316 = vunpack.c.l.b16 %v92
  %v317 = vunpack.c.l.b16 %v93
  %v318 = vunpack.c.l.b16 %v94
  %v319 = vunpack.c.l.b16 %v95
  %v320 = vunpack.c.l.b16 %v96
  %v321 = vunpack.c.l.b16 %v97
  %v322 = vunpack.c.l.b16 %v98
  %v323 = vunpack.c.l.b16 %v99
  %v324 = vunpack.c.l.b16 %v100
  %v325 = vunpack.c.l.b16 %v101
  %v326 = vunpack.c.l.b16 %v102
  %v327 = vunpack.c.l.b16 %v103
  %v328 = vunpack.c.l.b16 %v104
  %v329 = vunpack.c.l.b16 %v105
  %v330 = vunpack.c.l.b16 %v106
  %v331 = vunpack.c.l.b16 %v107
  %v332 = vunpack.c.l.b16 %v108
  %v333 = vunpack.c.l.b16 %v109
  %v334 = vunpack.c.l.b16 %v110
  %v335 = vunpack.c.l.b16 %v111
  %v336 = vunpack.c.l.b16 %v112
  %v337 = vunpack.c.l.b16 %v113
  %v338 = vunpack.c.l.b16 %v114
  %v339 = vunpack.c.l.b16 %v115
  %v340 = vunpack.c.l.b16 %v116
  %v341 = vunpack.c.l.b16 %v117
  %v342 = vunpack.c.l.b16 %v118
  %v343 = vunpack.c.l.b16 %v119
  %v344 = vunpack.c.l.b16 %v120
  %v345 = vunpack.c.l.b16 %v121
  %v346 = vunpack.c.l.b16 %v122
  %v347 = vunpack.c.l.b16 %v123
  %v348 = vunpack.c.l.b16 %v124
  %v349 = vunpack.c.l.b16 %v125
  %v350 = vunpack.c.l.b16 %v126
  %v351 = vunpack.c.l.b16 %v127
  %v352 = vpack.c.b16 %v305, %v304
  %v353 = vpack.c.b16 %v307, %v306
  %v354 = vpack.c.b16 %v309, %v308
  %v355 = vpack.c.b16 %v311, %v310
  %v356 = vpack.c.b16 %v313, %v312
  %v357 = vpack.c.b16 %v315, %v314
  %v358 = vpack.c.b16 %v317, %v316
  %v359 = vpack.c.b16 %v319, %v318
  %v360 = vpack.c.b16 %v321, %v320
  %v361 = vpack.c.b16 %v323, %v322
  %v362 = vpack.c.b16 %v325, %v324
  %v363 = vpack.c.b16 %v327, %v326
  %v364 = vpack.c.b16 %v329, %v328
  %v365 = vpack.c.b16 %v331, %v330
  %v366 = vpack.c.b16 %v333, %v332
  %v367 = vpack.c.b16 %v335, %v334
  %v368 = vpack.c.b16 %v337, %v336
  %v369 = vpack.c.b16 %v339, %v338
  %v370 = vpack.c.b16 %v341, %v340
  %v371 = vpack.c.b16 %v343, %v342
  %v372 = vpack.c.b16 %v345, %v344
  %v373 = vpack.c.b16 %v347, %v346
  %v374 = vpack.c.b16 %v349, %v348
  %v375 = vpack.c.b16 %v351, %v350
  %400 = vmatprep.subr.bf16.mxu0 0
  %401 = vmatpush1.bf16.msra.mxu0 %v352
  %402 = vmatprep.subr.bf16.mxu0 0
  %403 = vmatpush1.bf16.msra.mxu0 %v353
  %404 = vmatprep.subr.bf16.mxu0 0
  %405 = vmatpush1.bf16.msra.mxu0 %v354
  %406 = vmatprep.subr.bf16.mxu0 0
  %407 = vmatpush1.bf16.msra.mxu0 %v355
  %408 = vmatprep.subr.bf16.mxu0 0
  %409 = vmatpush1.bf16.msra.mxu0 %v356
  %410 = vmatprep.subr.bf16.mxu0 0
  %411 = vmatpush1.bf16.msra.mxu0 %v357
  %412 = vmatprep.subr.bf16.mxu0 0
  %413 = vmatpush1.bf16.msra.mxu0 %v358
  %414 = vmatprep.subr.bf16.mxu0 0
  %415 = vmatpush1.bf16.msra.mxu0 %v359
  %416 = vmatprep.subr.bf16.mxu0 0
  %417 = vmatpush1.bf16.msra.mxu0 %v360
  %418 = vmatprep.subr.bf16.mxu0 0
  %419 = vmatpush1.bf16.msra.mxu0 %v361
  %420 = vmatprep.subr.bf16.mxu0 0
  %421 = vmatpush1.bf16.msra.mxu0 %v362
  %422 = vmatprep.subr.bf16.mxu0 0
  %423 = vmatpush1.bf16.msra.mxu0 %v363
  %424 = vmatprep.subr.bf16.mxu0 0
  %425 = vmatpush1.bf16.msra.mxu0 %v364
  %426 = vmatprep.subr.bf16.mxu0 0
  %427 = vmatpush1.bf16.msra.mxu0 %v365
  %428 = vmatprep.subr.bf16.mxu0 0
  %429 = vmatpush1.bf16.msra.mxu0 %v366
  %430 = vmatprep.subr.bf16.mxu0 0
  %431 = vmatpush1.bf16.msra.mxu0 %v367
  %432 = vmatprep.mubr.bf16.mxu0 %v209
  %433 = vmatmul.mubr.bf16.gmra.mrb[0].mxu0 %v208
  %v434 = vpop.f32.mrb[0].mxu0
  %v435 = vadd.f32 0.0, %v434
  %v436 = vpop.f32.mrb[0].mxu0
  %v437 = vpop.f32.mrb[0].mxu0
  %v438 = vadd.f32 0.0, %v437
  %v439 = vpop.f32.mrb[0].mxu0
  %440 = vmatprep.mubr.bf16.mxu0 %v212
  %441 = vmatmul.mubr.bf16.gmra.mrb[0].mxu0 %v211
  %v442 = vpop.f32.mrb[0].mxu0
  %v443 = vadd.f32 0.0, %v442
  %v444 = vpop.f32.mrb[0].mxu0
  %v445 = vpop.f32.mrb[0].mxu0
  %v446 = vadd.f32 0.0, %v445
  %v447 = vpop.f32.mrb[0].mxu0
  %448 = vmatprep.mubr.bf16.mxu0 %v215
  %449 = vmatmul.mubr.bf16.gmra.mrb[0].mxu0 %v214
  %v450 = vpop.f32.mrb[0].mxu0
  %v451 = vadd.f32 0.0, %v450
  %v452 = vpop.f32.mrb[0].mxu0
  %v453 = vpop.f32.mrb[0].mxu0
  %v454 = vadd.f32 0.0, %v453
  %v455 = vpop.f32.mrb[0].mxu0
  %456 = vmatprep.mubr.bf16.mxu0 %v218
  %457 = vmatmul.mubr.bf16.gmra.mrb[0].mxu0 %v217
  %v458 = vpop.f32.mrb[0].mxu0
  %v459 = vadd.f32 0.0, %v458
  %v460 = vpop.f32.mrb[0].mxu0
  %v461 = vpop.f32.mrb[0].mxu0
  %v462 = vadd.f32 0.0, %v461
  %v463 = vpop.f32.mrb[0].mxu0
  %464 = vmatprep.mubr.bf16.mxu0 %v221
  %465 = vmatmul.mubr.bf16.gmra.mrb[0].mxu0 %v220
  %v466 = vpop.f32.mrb[0].mxu0
  %v467 = vadd.f32 0.0, %v466
  %v468 = vpop.f32.mrb[0].mxu0
  %v469 = vpop.f32.mrb[0].mxu0
  %v470 = vadd.f32 0.0, %v469
  %v471 = vpop.f32.mrb[0].mxu0
  %472 = vmatprep.mubr.bf16.mxu0 %v224
  %473 = vmatmul.mubr.bf16.gmra.mrb[0].mxu0 %v223
  %v474 = vpop.f32.mrb[0].mxu0
  %v475 = vadd.f32 0.0, %v474
  %v476 = vpop.f32.mrb[0].mxu0
  %v477 = vpop.f32.mrb[0].mxu0
  %v478 = vadd.f32 0.0, %v477
  %v479 = vpop.f32.mrb[0].mxu0
  %480 = vmatprep.mubr.bf16.mxu0 %v227
  %481 = vmatmul.mubr.bf16.gmra.mrb[0].mxu0 %v226
  %v482 = vpop.f32.mrb[0].mxu0
  %v483 = vadd.f32 0.0, %v482
  %v484 = vpop.f32.mrb[0].mxu0
  %v485 = vpop.f32.mrb[0].mxu0
  %v486 = vadd.f32 0.0, %v485
  %v487 = vpop.f32.mrb[0].mxu0
  %488 = vmatprep.mubr.bf16.mxu0 %v230
  %489 = vmatmul.mubr.bf16.gmra.mrb[0].mxu0 %v229
  %v490 = vpop.f32.mrb[0].mxu0
  %v491 = vadd.f32 0.0, %v490
  %v492 = vpop.f32.mrb[0].mxu0
  %v493 = vpop.f32.mrb[0].mxu0
  %v494 = vadd.f32 0.0, %v493
  %v495 = vpop.f32.mrb[0].mxu0
  %496 = vdwg.mxu0
  %497 = vmatprep.subr.bf16.mxu0 0
  %498 = vmatpush1.bf16.msra.mxu0 %v368
  %499 = vmatprep.subr.bf16.mxu0 0
  %500 = vmatpush1.bf16.msra.mxu0 %v369
  %501 = vmatprep.subr.bf16.mxu0 0
  %502 = vmatpush1.bf16.msra.mxu0 %v370
  %503 = vmatprep.subr.bf16.mxu0 0
  %504 = vmatpush1.bf16.msra.mxu0 %v371
  %505 = vmatprep.subr.bf16.mxu0 0
  %506 = vmatpush1.bf16.msra.mxu0 %v372
  %507 = vmatprep.subr.bf16.mxu0 0
  %508 = vmatpush1.bf16.msra.mxu0 %v373
  %509 = vmatprep.subr.bf16.mxu0 0
  %510 = vmatpush1.bf16.msra.mxu0 %v374
  %511 = vmatprep.subr.bf16.mxu0 0
  %512 = vmatpush1.bf16.msra.mxu0 %v375
  %513 = vmatprep.subr.bf16.mxu0 0
  %514 = vmatpush1.bf16.msra.mxu0 0
  %515 = vmatprep.subr.bf16.mxu0 0
  %516 = vmatpush1.bf16.msra.mxu0 0
  %517 = vmatprep.subr.bf16.mxu0 0
  %518 = vmatpush1.bf16.msra.mxu0 0
  %519 = vmatprep.subr.bf16.mxu0 0
  %520 = vmatpush1.bf16.msra.mxu0 0
  %521 = vmatprep.subr.bf16.mxu0 0
  %522 = vmatpush1.bf16.msra.mxu0 0
  %523 = vmatprep.subr.bf16.mxu0 0
  %524 = vmatpush1.bf16.msra.mxu0 0
  %525 = vmatprep.subr.bf16.mxu0 0
  %526 = vmatpush1.bf16.msra.mxu0 0
  %527 = vmatprep.subr.bf16.mxu0 0
  %528 = vmatpush1.bf16.msra.mxu0 0
  %529 = vmatprep.mubr.bf16.mxu0 0
  %530 = vmatmul.mubr.bf16.gmra.mrb[0].mxu0 %v210
  %v531 = vpop.f32.mrb[0].mxu0
  %v532 = vadd.f32 %v435, %v531
  %v533 = vpop.f32.mrb[0].mxu0
  %v534 = vpop.f32.mrb[0].mxu0
  %v535 = vadd.f32 %v438, %v534
  %v536 = vpop.f32.mrb[0].mxu0
  %537 = vmatprep.mubr.bf16.mxu0 0
  %538 = vmatmul.mubr.bf16.gmra.mrb[0].mxu0 %v213
  %v539 = vpop.f32.mrb[0].mxu0
  %v540 = vadd.f32 %v443, %v539
  %v541 = vpop.f32.mrb[0].mxu0
  %v542 = vpop.f32.mrb[0].mxu0
  %v543 = vadd.f32 %v446, %v542
  %v544 = vpop.f32.mrb[0].mxu0
  %545 = vmatprep.mubr.bf16.mxu0 0
  %546 = vmatmul.mubr.bf16.gmra.mrb[0].mxu0 %v216
  %v547 = vpop.f32.mrb[0].mxu0
  %v548 = vadd.f32 %v451, %v547
  %v549 = vpop.f32.mrb[0].mxu0
  %v550 = vpop.f32.mrb[0].mxu0
  %v551 = vadd.f32 %v454, %v550
  %v552 = vpop.f32.mrb[0].mxu0
  %553 = vmatprep.mubr.bf16.mxu0 0
  %554 = vmatmul.mubr.bf16.gmra.mrb[0].mxu0 %v219
  %v555 = vpop.f32.mrb[0].mxu0
  %v556 = vadd.f32 %v459, %v555
  %v557 = vpop.f32.mrb[0].mxu0
  %v558 = vpop.f32.mrb[0].mxu0
  %v559 = vadd.f32 %v462, %v558
  %v560 = vpop.f32.mrb[0].mxu0
  %561 = vmatprep.mubr.bf16.mxu0 0
  %562 = vmatmul.mubr.bf16.gmra.mrb[0].mxu0 %v222
  %v563 = vpop.f32.mrb[0].mxu0
  %v564 = vadd.f32 %v467, %v563
  %v565 = vpop.f32.mrb[0].mxu0
  %v566 = vpop.f32.mrb[0].mxu0
  %v567 = vadd.f32 %v470, %v566
  %v568 = vpop.f32.mrb[0].mxu0
  %569 = vmatprep.mubr.bf16.mxu0 0
  %570 = vmatmul.mubr.bf16.gmra.mrb[0].mxu0 %v225
  %v571 = vpop.f32.mrb[0].mxu0
  %v572 = vadd.f32 %v475, %v571
  %v573 = vpop.f32.mrb[0].mxu0
  %v574 = vpop.f32.mrb[0].mxu0
  %v575 = vadd.f32 %v478, %v574
  %v576 = vpop.f32.mrb[0].mxu0
  %577 = vmatprep.mubr.bf16.mxu0 0
  %578 = vmatmul.mubr.bf16.gmra.mrb[0].mxu0 %v228
  %v579 = vpop.f32.mrb[0].mxu0
  %v580 = vadd.f32 %v483, %v579
  %v581 = vpop.f32.mrb[0].mxu0
  %v582 = vpop.f32.mrb[0].mxu0
  %v583 = vadd.f32 %v486, %v582
  %v584 = vpop.f32.mrb[0].mxu0
  %585 = vmatprep.mubr.bf16.mxu0 0
  %586 = vmatmul.mubr.bf16.gmra.mrb[0].mxu0 %v231
  %v587 = vpop.f32.mrb[0].mxu0
  %v588 = vadd.f32 %v491, %v587
  %v589 = vpop.f32.mrb[0].mxu0
  %v590 = vpop.f32.mrb[0].mxu0
  %v591 = vadd.f32 %v494, %v590
  %v592 = vpop.f32.mrb[0].mxu0
  %593 = vdwg.mxu0
  %v594 = vadd.f32 %v32, %v532
  %v595 = vadd.f32 %v33, %v535
  %v596 = vadd.f32 %v34, %v540
  %v597 = vadd.f32 %v35, %v543
  %v598 = vadd.f32 %v36, %v548
  %v599 = vadd.f32 %v37, %v551
  %v600 = vadd.f32 %v38, %v556
  %v601 = vadd.f32 %v39, %v559
  %v602 = vadd.f32 %v40, %v564
  %v603 = vadd.f32 %v41, %v567
  %v604 = vadd.f32 %v42, %v572
  %v605 = vadd.f32 %v43, %v575
  %v606 = vadd.f32 %v44, %v580
  %v607 = vadd.f32 %v45, %v583
  %v608 = vadd.f32 %v46, %v588
  %v609 = vadd.f32 %v47, %v591
  %610 = vst [vmem:[#allocation2] sm:$0xff] %v594
  %611 = vst [vmem:[#allocation2 + $0x8] sm:$0xff] %v595
  %612 = vst [vmem:[#allocation2 + $0x10] sm:$0xff] %v596
  %613 = vst [vmem:[#allocation2 + $0x18] sm:$0xff] %v597
  %614 = vst [vmem:[#allocation2 + $0x20] sm:$0xff] %v598
  %615 = vst [vmem:[#allocation2 + $0x28] sm:$0xff] %v599
  %616 = vst [vmem:[#allocation2 + $0x30] sm:$0xff] %v600
  %617 = vst [vmem:[#allocation2 + $0x38] sm:$0xff] %v601
  %618 = vst [vmem:[#allocation2 + $0x40] sm:$0xff] %v602
  %619 = vst [vmem:[#allocation2 + $0x48] sm:$0xff] %v603
  %620 = vst [vmem:[#allocation2 + $0x50] sm:$0xff] %v604
  %621 = vst [vmem:[#allocation2 + $0x58] sm:$0xff] %v605
  %622 = vst [vmem:[#allocation2 + $0x60] sm:$0xff] %v606
  %623 = vst [vmem:[#allocation2 + $0x68] sm:$0xff] %v607
  %624 = vst [vmem:[#allocation2 + $0x70] sm:$0xff] %v608
  %625 = vst [vmem:[#allocation2 + $0x78] sm:$0xff] %v609
  // Predicated region
  $region14: #{dmodule_forward.7} parent=0 // pred_check
    %p626 = pneg %p12
  $region15: #{dmodule_forward.7} parent=0 // pred_check_branch
    %628 = sbr.rel (%p626) target = $region17
  $region16: #{dmodule_forward.7} parent=0 // pred_region
    %v629 = vld [vmem:[#allocation2] sm:$0xff]
    %v630 = vld [vmem:[#allocation2 + $0x8] sm:$0xff]
    %v631 = vld [vmem:[#allocation2 + $0x10] sm:$0xff]
    %v632 = vld [vmem:[#allocation2 + $0x18] sm:$0xff]
    %v633 = vld [vmem:[#allocation2 + $0x20] sm:$0xff]
    %v634 = vld [vmem:[#allocation2 + $0x28] sm:$0xff]
    %v635 = vld [vmem:[#allocation2 + $0x30] sm:$0xff]
    %v636 = vld [vmem:[#allocation2 + $0x38] sm:$0xff]
    %v637 = vld [vmem:[#allocation2 + $0x40] sm:$0xff]
    %v638 = vld [vmem:[#allocation2 + $0x48] sm:$0xff]
    %v639 = vld [vmem:[#allocation2 + $0x50] sm:$0xff]
    %v640 = vld [vmem:[#allocation2 + $0x58] sm:$0xff]
    %v641 = vld [vmem:[#allocation2 + $0x60] sm:$0xff]
    %v642 = vld [vmem:[#allocation2 + $0x68] sm:$0xff]
    %v643 = vld [vmem:[#allocation2 + $0x70] sm:$0xff]
    %v644 = vld [vmem:[#allocation2 + $0x78] sm:$0xff]
    %645 = vst [vmem:[%s2] sm:$0xff] %v629
    %646 = vst [vmem:[%s2 + $0x8] sm:$0xff] %v630
    %647 = vst [vmem:[%s2 + $0x10] sm:$0xff] %v631
    %648 = vst [vmem:[%s2 + $0x18] sm:$0xff] %v632
    %649 = vst [vmem:[%s2 + $0x20] sm:$0xff] %v633
    %650 = vst [vmem:[%s2 + $0x28] sm:$0xff] %v634
    %651 = vst [vmem:[%s2 + $0x30] sm:$0xff] %v635
    %652 = vst [vmem:[%s2 + $0x38] sm:$0xff] %v636
    %653 = vst [vmem:[%s2 + $0x40] sm:$0xff] %v637
    %654 = vst [vmem:[%s2 + $0x48] sm:$0xff] %v638
    %655 = vst [vmem:[%s2 + $0x50] sm:$0xff] %v639
    %656 = vst [vmem:[%s2 + $0x58] sm:$0xff] %v640
    %657 = vst [vmem:[%s2 + $0x60] sm:$0xff] %v641
    %658 = vst [vmem:[%s2 + $0x68] sm:$0xff] %v642
    %659 = vst [vmem:[%s2 + $0x70] sm:$0xff] %v643
    %660 = vst [vmem:[%s2 + $0x78] sm:$0xff] %v644
  $region17: #{dmodule_forward.7} parent=0 // pred_fallthru
    _
  // Predicated region
  $region18: #{dmodule_forward.7} parent=0 // pred_check
    _
  $region19: #{dmodule_forward.7} parent=0 // pred_check_branch
    %662 = sbr.rel (0) target = $region21
  $region20: #{dmodule_forward.7} parent=0 // pred_region
    _
  $region21: #{dmodule_forward.7} parent=0 // pred_fallthru
    _
  // Predicated region
  $region22: #{dmodule_forward.7} parent=0 // pred_check
    _
  $region23: #{dmodule_forward.7} parent=0 // pred_check_branch
    %664 = sbr.rel (0) target = $region25
  $region24: #{dmodule_forward.7} parent=0 // pred_region
    _
  $region25: #{dmodule_forward.7} parent=0 // pred_fallthru
    _

// kernel: dmodule_forward.11
$region0: #{dmodule_forward.11}
  #allocation0 [shape = 'u32[]', space=smem, size = 0x4, offset = 0x4, fixed_abs, tag = 'smem constant byte address 0x4 - core index']
  #allocation1 [shape = 'u32[144,128]{1,0:T(1,128)}', space=vmem, size = 0x12000, scoped, tag = 'internal scratch']
  #allocation2 [shape = 'f32[128,256]{1,0:T(8,128)}', space=vmem, size = 0x20000, scoped, tag = 'scratch operand']
  %s0 = inlined_call_operand.vmem [shape: bf16[128,128], index: 0, kind: input, shape index: {}]
  %s1 = inlined_call_operand.vmem [shape: bf16[128,256], index: 1, kind: input, shape index: {}]
  %s2 = inlined_call_operand.vmem [shape: f32[128,256], index: 2, kind: output, shape index: {}]
  %s3 = sld [smem:[#allocation0]]
  $region26: #{dmodule_forward.11} parent=0
    _
  %s5 = ssub.s32 1, %s3
  %s6 = scalar_select 0, %s5, %s3
  // Predicated region
  $region2: #{dmodule_forward.11} parent=0 // pred_check
    _
  $region3: #{dmodule_forward.11} parent=0 // pred_check_branch
    %8 = sbr.rel (0) target = $region5
  $region4: #{dmodule_forward.11} parent=0 // pred_region
    _
  $region5: #{dmodule_forward.11} parent=0 // pred_fallthru
    _
  // Predicated region
  $region6: #{dmodule_forward.11} parent=0 // pred_check
    _
  $region7: #{dmodule_forward.11} parent=0 // pred_check_branch
    %10 = sbr.rel (0) target = $region9
  $region8: #{dmodule_forward.11} parent=0 // pred_region
    _
  $region9: #{dmodule_forward.11} parent=0 // pred_fallthru
    _
  %p12 = scmp.eq.s32.totalorder 0, 0
  // Predicated region
  $region10: #{dmodule_forward.11} parent=0 // pred_check
    %p13 = pneg %p12
  $region11: #{dmodule_forward.11} parent=0 // pred_check_branch
    %15 = sbr.rel (%p13) target = $region13
  $region12: #{dmodule_forward.11} parent=0 // pred_region
    %16 = vst [vmem:[#allocation2] sm:$0xff] 0.0
    %17 = vst [vmem:[#allocation2 + $0x8] sm:$0xff] 0.0
    %18 = vst [vmem:[#allocation2 + $0x10] sm:$0xff] 0.0
    %19 = vst [vmem:[#allocation2 + $0x18] sm:$0xff] 0.0
    %20 = vst [vmem:[#allocation2 + $0x20] sm:$0xff] 0.0
    %21 = vst [vmem:[#allocation2 + $0x28] sm:$0xff] 0.0
    %22 = vst [vmem:[#allocation2 + $0x30] sm:$0xff] 0.0
    %23 = vst [vmem:[#allocation2 + $0x38] sm:$0xff] 0.0
    %24 = vst [vmem:[#allocation2 + $0x40] sm:$0xff] 0.0
    %25 = vst [vmem:[#allocation2 + $0x48] sm:$0xff] 0.0
    %26 = vst [vmem:[#allocation2 + $0x50] sm:$0xff] 0.0
    %27 = vst [vmem:[#allocation2 + $0x58] sm:$0xff] 0.0
    %28 = vst [vmem:[#allocation2 + $0x60] sm:$0xff] 0.0
    %29 = vst [vmem:[#allocation2 + $0x68] sm:$0xff] 0.0
    %30 = vst [vmem:[#allocation2 + $0x70] sm:$0xff] 0.0
    %31 = vst [vmem:[#allocation2 + $0x78] sm:$0xff] 0.0
    %32 = vst [vmem:[#allocation2 + $0x80] sm:$0xff] 0.0
    %33 = vst [vmem:[#allocation2 + $0x88] sm:$0xff] 0.0
    %34 = vst [vmem:[#allocation2 + $0x90] sm:$0xff] 0.0
    %35 = vst [vmem:[#allocation2 + $0x98] sm:$0xff] 0.0
    %36 = vst [vmem:[#allocation2 + $0xa0] sm:$0xff] 0.0
    %37 = vst [vmem:[#allocation2 + $0xa8] sm:$0xff] 0.0
    %38 = vst [vmem:[#allocation2 + $0xb0] sm:$0xff] 0.0
    %39 = vst [vmem:[#allocation2 + $0xb8] sm:$0xff] 0.0
    %40 = vst [vmem:[#allocation2 + $0xc0] sm:$0xff] 0.0
    %41 = vst [vmem:[#allocation2 + $0xc8] sm:$0xff] 0.0
    %42 = vst [vmem:[#allocation2 + $0xd0] sm:$0xff] 0.0
    %43 = vst [vmem:[#allocation2 + $0xd8] sm:$0xff] 0.0
    %44 = vst [vmem:[#allocation2 + $0xe0] sm:$0xff] 0.0
    %45 = vst [vmem:[#allocation2 + $0xe8] sm:$0xff] 0.0
    %46 = vst [vmem:[#allocation2 + $0xf0] sm:$0xff] 0.0
    %47 = vst [vmem:[#allocation2 + $0xf8] sm:$0xff] 0.0
  $region13: #{dmodule_forward.11} parent=0 // pred_fallthru
    _
  %v48 = vld [vmem:[#allocation2] sm:$0xff]
  %v49 = vld [vmem:[#allocation2 + $0x8] sm:$0xff]
  %v50 = vld [vmem:[#allocation2 + $0x10] sm:$0xff]
  %v51 = vld [vmem:[#allocation2 + $0x18] sm:$0xff]
  %v52 = vld [vmem:[#allocation2 + $0x20] sm:$0xff]
  %v53 = vld [vmem:[#allocation2 + $0x28] sm:$0xff]
  %v54 = vld [vmem:[#allocation2 + $0x30] sm:$0xff]
  %v55 = vld [vmem:[#allocation2 + $0x38] sm:$0xff]
  %v56 = vld [vmem:[#allocation2 + $0x40] sm:$0xff]
  %v57 = vld [vmem:[#allocation2 + $0x48] sm:$0xff]
  %v58 = vld [vmem:[#allocation2 + $0x50] sm:$0xff]
  %v59 = vld [vmem:[#allocation2 + $0x58] sm:$0xff]
  %v60 = vld [vmem:[#allocation2 + $0x60] sm:$0xff]
  %v61 = vld [vmem:[#allocation2 + $0x68] sm:$0xff]
  %v62 = vld [vmem:[#allocation2 + $0x70] sm:$0xff]
  %v63 = vld [vmem:[#allocation2 + $0x78] sm:$0xff]
  %v64 = vld [vmem:[#allocation2 + $0x80] sm:$0xff]
  %v65 = vld [vmem:[#allocation2 + $0x88] sm:$0xff]
  %v66 = vld [vmem:[#allocation2 + $0x90] sm:$0xff]
  %v67 = vld [vmem:[#allocation2 + $0x98] sm:$0xff]
  %v68 = vld [vmem:[#allocation2 + $0xa0] sm:$0xff]
  %v69 = vld [vmem:[#allocation2 + $0xa8] sm:$0xff]
  %v70 = vld [vmem:[#allocation2 + $0xb0] sm:$0xff]
  %v71 = vld [vmem:[#allocation2 + $0xb8] sm:$0xff]
  %v72 = vld [vmem:[#allocation2 + $0xc0] sm:$0xff]
  %v73 = vld [vmem:[#allocation2 + $0xc8] sm:$0xff]
  %v74 = vld [vmem:[#allocation2 + $0xd0] sm:$0xff]
  %v75 = vld [vmem:[#allocation2 + $0xd8] sm:$0xff]
  %v76 = vld [vmem:[#allocation2 + $0xe0] sm:$0xff]
  %v77 = vld [vmem:[#allocation2 + $0xe8] sm:$0xff]
  %v78 = vld [vmem:[#allocation2 + $0xf0] sm:$0xff]
  %v79 = vld [vmem:[#allocation2 + $0xf8] sm:$0xff]
  %v80 = vld [vmem:[%s0] sm:$0xf]
  %v81 = vld [vmem:[%s0 + $0x4] sm:$0xf]
  %v82 = vld [vmem:[%s0 + $0x8] sm:$0xf]
  %v83 = vld [vmem:[%s0 + $0xc] sm:$0xf]
  %v84 = vld [vmem:[%s0 + $0x10] sm:$0xf]
  %v85 = vld [vmem:[%s0 + $0x14] sm:$0xf]
  %v86 = vld [vmem:[%s0 + $0x18] sm:$0xf]
  %v87 = vld [vmem:[%s0 + $0x1c] sm:$0xf]
  %v88 = vld [vmem:[%s0 + $0x20] sm:$0xf]
  %v89 = vld [vmem:[%s0 + $0x24] sm:$0xf]
  %v90 = vld [vmem:[%s0 + $0x28] sm:$0xf]
  %v91 = vld [vmem:[%s0 + $0x2c] sm:$0xf]
  %v92 = vld [vmem:[%s0 + $0x30] sm:$0xf]
  %v93 = vld [vmem:[%s0 + $0x34] sm:$0xf]
  %v94 = vld [vmem:[%s0 + $0x38] sm:$0xf]
  %v95 = vld [vmem:[%s0 + $0x3c] sm:$0xf]
  %v96 = vld [vmem:[%s1] sm:$0xff]
  %v97 = vld [vmem:[%s1 + $0x8] sm:$0xff]
  %v98 = vld [vmem:[%s1 + $0x10] sm:$0xff]
  %v99 = vld [vmem:[%s1 + $0x18] sm:$0xff]
  %v100 = vld [vmem:[%s1 + $0x20] sm:$0xff]
  %v101 = vld [vmem:[%s1 + $0x28] sm:$0xff]
  %v102 = vld [vmem:[%s1 + $0x30] sm:$0xff]
  %v103 = vld [vmem:[%s1 + $0x38] sm:$0xff]
  %v104 = vld [vmem:[%s1 + $0x40] sm:$0xff]
  %v105 = vld [vmem:[%s1 + $0x48] sm:$0xff]
  %v106 = vld [vmem:[%s1 + $0x50] sm:$0xff]
  %v107 = vld [vmem:[%s1 + $0x58] sm:$0xff]
  %v108 = vld [vmem:[%s1 + $0x60] sm:$0xff]
  %v109 = vld [vmem:[%s1 + $0x68] sm:$0xff]
  %v110 = vld [vmem:[%s1 + $0x70] sm:$0xff]
  %v111 = vld [vmem:[%s1 + $0x78] sm:$0xff]
  %v128 = vunpack.c.l.b16 %v80
  %v129 = vunpack.c.l.b16 %v81
  %v130 = vunpack.c.l.b16 %v82
  %v131 = vunpack.c.l.b16 %v83
  %v132 = vunpack.c.l.b16 %v84
  %v133 = vunpack.c.l.b16 %v85
  %v134 = vunpack.c.l.b16 %v86
  %v135 = vunpack.c.l.b16 %v87
  %v136 = vunpack.c.l.b16 %v88
  %v137 = vunpack.c.l.b16 %v89
  %v138 = vunpack.c.l.b16 %v90
  %v139 = vunpack.c.l.b16 %v91
  %v140 = vunpack.c.l.b16 %v92
  %v141 = vunpack.c.l.b16 %v93
  %v142 = vunpack.c.l.b16 %v94
  %v143 = vunpack.c.l.b16 %v95
  %v144 = vpack.c.b16 %v129, %v128
  %v145 = vpack.c.b16 %v131, %v130
  %v146 = vpack.c.b16 %v133, %v132
  %v147 = vpack.c.b16 %v135, %v134
  %v148 = vpack.c.b16 %v137, %v136
  %v149 = vpack.c.b16 %v139, %v138
  %v150 = vpack.c.b16 %v141, %v140
  %v151 = vpack.c.b16 %v143, %v142
  %v176 = vunpack.c.l.b16 %v96
  %v177 = vunpack.c.h.b16 %v96
  %v178 = vunpack.c.l.b16 %v97
  %v179 = vunpack.c.h.b16 %v97
  %v180 = vunpack.c.l.b16 %v98
  %v181 = vunpack.c.h.b16 %v98
  %v182 = vunpack.c.l.b16 %v99
  %v183 = vunpack.c.h.b16 %v99
  %v184 = vunpack.c.l.b16 %v100
  %v185 = vunpack.c.h.b16 %v100
  %v186 = vunpack.c.l.b16 %v101
  %v187 = vunpack.c.h.b16 %v101
  %v188 = vunpack.c.l.b16 %v102
  %v189 = vunpack.c.h.b16 %v102
  %v190 = vunpack.c.l.b16 %v103
  %v191 = vunpack.c.h.b16 %v103
  %v192 = vunpack.c.l.b16 %v104
  %v193 = vunpack.c.h.b16 %v104
  %v194 = vunpack.c.l.b16 %v105
  %v195 = vunpack.c.h.b16 %v105
  %v196 = vunpack.c.l.b16 %v106
  %v197 = vunpack.c.h.b16 %v106
  %v198 = vunpack.c.l.b16 %v107
  %v199 = vunpack.c.h.b16 %v107
  %v200 = vunpack.c.l.b16 %v108
  %v201 = vunpack.c.h.b16 %v108
  %v202 = vunpack.c.l.b16 %v109
  %v203 = vunpack.c.h.b16 %v109
  %v204 = vunpack.c.l.b16 %v110
  %v205 = vunpack.c.h.b16 %v110
  %v206 = vunpack.c.l.b16 %v111
  %v207 = vunpack.c.h.b16 %v111
  %v208 = vpack.c.b16 %v178, %v176
  %v209 = vpack.c.b16 %v179, %v177
  %v210 = vpack.c.b16 %v182, %v180
  %v211 = vpack.c.b16 %v183, %v181
  %v212 = vpack.c.b16 %v186, %v184
  %v213 = vpack.c.b16 %v187, %v185
  %v214 = vpack.c.b16 %v190, %v188
  %v215 = vpack.c.b16 %v191, %v189
  %v216 = vpack.c.b16 %v194, %v192
  %v217 = vpack.c.b16 %v195, %v193
  %v218 = vpack.c.b16 %v198, %v196
  %v219 = vpack.c.b16 %v199, %v197
  %v220 = vpack.c.b16 %v202, %v200
  %v221 = vpack.c.b16 %v203, %v201
  %v222 = vpack.c.b16 %v206, %v204
  %v223 = vpack.c.b16 %v207, %v205
  %240 = vmatprep.subr.bf16.mxu0 %v209
  %241 = vmatpush1.bf16.msra.mxu0 %v208
  %242 = vmatprep.subr.bf16.mxu0 %v211
  %243 = vmatpush1.bf16.msra.mxu0 %v210
  %244 = vmatprep.subr.bf16.mxu0 %v213
  %245 = vmatpush1.bf16.msra.mxu0 %v212
  %246 = vmatprep.subr.bf16.mxu0 %v215
  %247 = vmatpush1.bf16.msra.mxu0 %v214
  %248 = vmatprep.subr.bf16.mxu0 %v217
  %249 = vmatpush1.bf16.msra.mxu0 %v216
  %250 = vmatprep.subr.bf16.mxu0 %v219
  %251 = vmatpush1.bf16.msra.mxu0 %v218
  %252 = vmatprep.subr.bf16.mxu0 %v221
  %253 = vmatpush1.bf16.msra.mxu0 %v220
  %254 = vmatprep.subr.bf16.mxu0 %v223
  %255 = vmatpush1.bf16.msra.mxu0 %v222
  %256 = vmatprep.subr.bf16.mxu0 0
  %257 = vmatpush1.bf16.msra.mxu0 0
  %258 = vmatprep.subr.bf16.mxu0 0
  %259 = vmatpush1.bf16.msra.mxu0 0
  %260 = vmatprep.subr.bf16.mxu0 0
  %261 = vmatpush1.bf16.msra.mxu0 0
  %262 = vmatprep.subr.bf16.mxu0 0
  %263 = vmatpush1.bf16.msra.mxu0 0
  %264 = vmatprep.subr.bf16.mxu0 0
  %265 = vmatpush1.bf16.msra.mxu0 0
  %266 = vmatprep.subr.bf16.mxu0 0
  %267 = vmatpush1.bf16.msra.mxu0 0
  %268 = vmatprep.subr.bf16.mxu0 0
  %269 = vmatpush1.bf16.msra.mxu0 0
  %270 = vmatprep.subr.bf16.mxu0 0
  %271 = vmatpush1.bf16.msra.mxu0 0
  %272 = vmatprep.mubr.bf16.mxu0 0
  %273 = vmatmul.mubr.bf16.gmra.mrb[0].mxu0 %v144
  %v274 = vpop.f32.mrb[0].mxu0
  %v275 = vadd.f32 0.0, %v274
  %v276 = vpop.f32.mrb[0].mxu0
  %v277 = vadd.f32 0.0, %v276
  %v278 = vpop.f32.mrb[0].mxu0
  %v279 = vadd.f32 0.0, %v278
  %v280 = vpop.f32.mrb[0].mxu0
  %v281 = vadd.f32 0.0, %v280
  %282 = vmatprep.mubr.bf16.mxu0 0
  %283 = vmatmul.mubr.bf16.gmra.mrb[0].mxu0 %v145
  %v284 = vpop.f32.mrb[0].mxu0
  %v285 = vadd.f32 0.0, %v284
  %v286 = vpop.f32.mrb[0].mxu0
  %v287 = vadd.f32 0.0, %v286
  %v288 = vpop.f32.mrb[0].mxu0
  %v289 = vadd.f32 0.0, %v288
  %v290 = vpop.f32.mrb[0].mxu0
  %v291 = vadd.f32 0.0, %v290
  %292 = vmatprep.mubr.bf16.mxu0 0
  %293 = vmatmul.mubr.bf16.gmra.mrb[0].mxu0 %v146
  %v294 = vpop.f32.mrb[0].mxu0
  %v295 = vadd.f32 0.0, %v294
  %v296 = vpop.f32.mrb[0].mxu0
  %v297 = vadd.f32 0.0, %v296
  %v298 = vpop.f32.mrb[0].mxu0
  %v299 = vadd.f32 0.0, %v298
  %v300 = vpop.f32.mrb[0].mxu0
  %v301 = vadd.f32 0.0, %v300
  %302 = vmatprep.mubr.bf16.mxu0 0
  %303 = vmatmul.mubr.bf16.gmra.mrb[0].mxu0 %v147
  %v304 = vpop.f32.mrb[0].mxu0
  %v305 = vadd.f32 0.0, %v304
  %v306 = vpop.f32.mrb[0].mxu0
  %v307 = vadd.f32 0.0, %v306
  %v308 = vpop.f32.mrb[0].mxu0
  %v309 = vadd.f32 0.0, %v308
  %v310 = vpop.f32.mrb[0].mxu0
  %v311 = vadd.f32 0.0, %v310
  %312 = vmatprep.mubr.bf16.mxu0 0
  %313 = vmatmul.mubr.bf16.gmra.mrb[0].mxu0 %v148
  %v314 = vpop.f32.mrb[0].mxu0
  %v315 = vadd.f32 0.0, %v314
  %v316 = vpop.f32.mrb[0].mxu0
  %v317 = vadd.f32 0.0, %v316
  %v318 = vpop.f32.mrb[0].mxu0
  %v319 = vadd.f32 0.0, %v318
  %v320 = vpop.f32.mrb[0].mxu0
  %v321 = vadd.f32 0.0, %v320
  %322 = vmatprep.mubr.bf16.mxu0 0
  %323 = vmatmul.mubr.bf16.gmra.mrb[0].mxu0 %v149
  %v324 = vpop.f32.mrb[0].mxu0
  %v325 = vadd.f32 0.0, %v324
  %v326 = vpop.f32.mrb[0].mxu0
  %v327 = vadd.f32 0.0, %v326
  %v328 = vpop.f32.mrb[0].mxu0
  %v329 = vadd.f32 0.0, %v328
  %v330 = vpop.f32.mrb[0].mxu0
  %v331 = vadd.f32 0.0, %v330
  %332 = vmatprep.mubr.bf16.mxu0 0
  %333 = vmatmul.mubr.bf16.gmra.mrb[0].mxu0 %v150
  %v334 = vpop.f32.mrb[0].mxu0
  %v335 = vadd.f32 0.0, %v334
  %v336 = vpop.f32.mrb[0].mxu0
  %v337 = vadd.f32 0.0, %v336
  %v338 = vpop.f32.mrb[0].mxu0
  %v339 = vadd.f32 0.0, %v338
  %v340 = vpop.f32.mrb[0].mxu0
  %v341 = vadd.f32 0.0, %v340
  %342 = vmatprep.mubr.bf16.mxu0 0
  %343 = vmatmul.mubr.bf16.gmra.mrb[0].mxu0 %v151
  %v344 = vpop.f32.mrb[0].mxu0
  %v345 = vadd.f32 0.0, %v344
  %v346 = vpop.f32.mrb[0].mxu0
  %v347 = vadd.f32 0.0, %v346
  %v348 = vpop.f32.mrb[0].mxu0
  %v349 = vadd.f32 0.0, %v348
  %v350 = vpop.f32.mrb[0].mxu0
  %v351 = vadd.f32 0.0, %v350
  %352 = vdwg.mxu0
  %v353 = vadd.f32 %v48, %v275
  %v354 = vadd.f32 %v49, %v277
  %v355 = vadd.f32 %v50, %v279
  %v356 = vadd.f32 %v51, %v281
  %v357 = vadd.f32 %v52, %v285
  %v358 = vadd.f32 %v53, %v287
  %v359 = vadd.f32 %v54, %v289
  %v360 = vadd.f32 %v55, %v291
  %v361 = vadd.f32 %v56, %v295
  %v362 = vadd.f32 %v57, %v297
  %v363 = vadd.f32 %v58, %v299
  %v364 = vadd.f32 %v59, %v301
  %v365 = vadd.f32 %v60, %v305
  %v366 = vadd.f32 %v61, %v307
  %v367 = vadd.f32 %v62, %v309
  %v368 = vadd.f32 %v63, %v311
  %v369 = vadd.f32 %v64, %v315
  %v370 = vadd.f32 %v65, %v317
  %v371 = vadd.f32 %v66, %v319
  %v372 = vadd.f32 %v67, %v321
  %v373 = vadd.f32 %v68, %v325
  %v374 = vadd.f32 %v69, %v327
  %v375 = vadd.f32 %v70, %v329
  %v376 = vadd.f32 %v71, %v331
  %v377 = vadd.f32 %v72, %v335
  %v378 = vadd.f32 %v73, %v337
  %v379 = vadd.f32 %v74, %v339
  %v380 = vadd.f32 %v75, %v341
  %v381 = vadd.f32 %v76, %v345
  %v382 = vadd.f32 %v77, %v347
  %v383 = vadd.f32 %v78, %v349
  %v384 = vadd.f32 %v79, %v351
  %385 = vst [vmem:[#allocation2] sm:$0xff] %v353
  %386 = vst [vmem:[#allocation2 + $0x8] sm:$0xff] %v354
  %387 = vst [vmem:[#allocation2 + $0x10] sm:$0xff] %v355
  %388 = vst [vmem:[#allocation2 + $0x18] sm:$0xff] %v356
  %389 = vst [vmem:[#allocation2 + $0x20] sm:$0xff] %v357
  %390 = vst [vmem:[#allocation2 + $0x28] sm:$0xff] %v358
  %391 = vst [vmem:[#allocation2 + $0x30] sm:$0xff] %v359
  %392 = vst [vmem:[#allocation2 + $0x38] sm:$0xff] %v360
  %393 = vst [vmem:[#allocation2 + $0x40] sm:$0xff] %v361
  %394 = vst [vmem:[#allocation2 + $0x48] sm:$0xff] %v362
  %395 = vst [vmem:[#allocation2 + $0x50] sm:$0xff] %v363
  %396 = vst [vmem:[#allocation2 + $0x58] sm:$0xff] %v364
  %397 = vst [vmem:[#allocation2 + $0x60] sm:$0xff] %v365
  %398 = vst [vmem:[#allocation2 + $0x68] sm:$0xff] %v366
  %399 = vst [vmem:[#allocation2 + $0x70] sm:$0xff] %v367
  %400 = vst [vmem:[#allocation2 + $0x78] sm:$0xff] %v368
  %401 = vst [vmem:[#allocation2 + $0x80] sm:$0xff] %v369
  %402 = vst [vmem:[#allocation2 + $0x88] sm:$0xff] %v370
  %403 = vst [vmem:[#allocation2 + $0x90] sm:$0xff] %v371
  %404 = vst [vmem:[#allocation2 + $0x98] sm:$0xff] %v372
  %405 = vst [vmem:[#allocation2 + $0xa0] sm:$0xff] %v373
  %406 = vst [vmem:[#allocation2 + $0xa8] sm:$0xff] %v374
  %407 = vst [vmem:[#allocation2 + $0xb0] sm:$0xff] %v375
  %408 = vst [vmem:[#allocation2 + $0xb8] sm:$0xff] %v376
  %409 = vst [vmem:[#allocation2 + $0xc0] sm:$0xff] %v377
  %410 = vst [vmem:[#allocation2 + $0xc8] sm:$0xff] %v378
  %411 = vst [vmem:[#allocation2 + $0xd0] sm:$0xff] %v379
  %412 = vst [vmem:[#allocation2 + $0xd8] sm:$0xff] %v380
  %413 = vst [vmem:[#allocation2 + $0xe0] sm:$0xff] %v381
  %414 = vst [vmem:[#allocation2 + $0xe8] sm:$0xff] %v382
  %415 = vst [vmem:[#allocation2 + $0xf0] sm:$0xff] %v383
  %416 = vst [vmem:[#allocation2 + $0xf8] sm:$0xff] %v384
  // Predicated region
  $region14: #{dmodule_forward.11} parent=0 // pred_check
    %p417 = pneg %p12
  $region15: #{dmodule_forward.11} parent=0 // pred_check_branch
    %419 = sbr.rel (%p417) target = $region17
  $region16: #{dmodule_forward.11} parent=0 // pred_region
    %v420 = vld [vmem:[#allocation2] sm:$0xff]
    %v421 = vld [vmem:[#allocation2 + $0x8] sm:$0xff]
    %v422 = vld [vmem:[#allocation2 + $0x10] sm:$0xff]
    %v423 = vld [vmem:[#allocation2 + $0x18] sm:$0xff]
    %v424 = vld [vmem:[#allocation2 + $0x20] sm:$0xff]
    %v425 = vld [vmem:[#allocation2 + $0x28] sm:$0xff]
    %v426 = vld [vmem:[#allocation2 + $0x30] sm:$0xff]
    %v427 = vld [vmem:[#allocation2 + $0x38] sm:$0xff]
    %v428 = vld [vmem:[#allocation2 + $0x40] sm:$0xff]
    %v429 = vld [vmem:[#allocation2 + $0x48] sm:$0xff]
    %v430 = vld [vmem:[#allocation2 + $0x50] sm:$0xff]
    %v431 = vld [vmem:[#allocation2 + $0x58] sm:$0xff]
    %v432 = vld [vmem:[#allocation2 + $0x60] sm:$0xff]
    %v433 = vld [vmem:[#allocation2 + $0x68] sm:$0xff]
    %v434 = vld [vmem:[#allocation2 + $0x70] sm:$0xff]
    %v435 = vld [vmem:[#allocation2 + $0x78] sm:$0xff]
    %v436 = vld [vmem:[#allocation2 + $0x80] sm:$0xff]
    %v437 = vld [vmem:[#allocation2 + $0x88] sm:$0xff]
    %v438 = vld [vmem:[#allocation2 + $0x90] sm:$0xff]
    %v439 = vld [vmem:[#allocation2 + $0x98] sm:$0xff]
    %v440 = vld [vmem:[#allocation2 + $0xa0] sm:$0xff]
    %v441 = vld [vmem:[#allocation2 + $0xa8] sm:$0xff]
    %v442 = vld [vmem:[#allocation2 + $0xb0] sm:$0xff]
    %v443 = vld [vmem:[#allocation2 + $0xb8] sm:$0xff]
    %v444 = vld [vmem:[#allocation2 + $0xc0] sm:$0xff]
    %v445 = vld [vmem:[#allocation2 + $0xc8] sm:$0xff]
    %v446 = vld [vmem:[#allocation2 + $0xd0] sm:$0xff]
    %v447 = vld [vmem:[#allocation2 + $0xd8] sm:$0xff]
    %v448 = vld [vmem:[#allocation2 + $0xe0] sm:$0xff]
    %v449 = vld [vmem:[#allocation2 + $0xe8] sm:$0xff]
    %v450 = vld [vmem:[#allocation2 + $0xf0] sm:$0xff]
    %v451 = vld [vmem:[#allocation2 + $0xf8] sm:$0xff]
    %452 = vst [vmem:[%s2] sm:$0xff] %v420
    %453 = vst [vmem:[%s2 + $0x8] sm:$0xff] %v421
    %454 = vst [vmem:[%s2 + $0x10] sm:$0xff] %v422
    %455 = vst [vmem:[%s2 + $0x18] sm:$0xff] %v423
    %456 = vst [vmem:[%s2 + $0x20] sm:$0xff] %v424
    %457 = vst [vmem:[%s2 + $0x28] sm:$0xff] %v425
    %458 = vst [vmem:[%s2 + $0x30] sm:$0xff] %v426
    %459 = vst [vmem:[%s2 + $0x38] sm:$0xff] %v427
    %460 = vst [vmem:[%s2 + $0x40] sm:$0xff] %v428
    %461 = vst [vmem:[%s2 + $0x48] sm:$0xff] %v429
    %462 = vst [vmem:[%s2 + $0x50] sm:$0xff] %v430
    %463 = vst [vmem:[%s2 + $0x58] sm:$0xff] %v431
    %464 = vst [vmem:[%s2 + $0x60] sm:$0xff] %v432
    %465 = vst [vmem:[%s2 + $0x68] sm:$0xff] %v433
    %466 = vst [vmem:[%s2 + $0x70] sm:$0xff] %v434
    %467 = vst [vmem:[%s2 + $0x78] sm:$0xff] %v435
    %468 = vst [vmem:[%s2 + $0x80] sm:$0xff] %v436
    %469 = vst [vmem:[%s2 + $0x88] sm:$0xff] %v437
    %470 = vst [vmem:[%s2 + $0x90] sm:$0xff] %v438
    %471 = vst [vmem:[%s2 + $0x98] sm:$0xff] %v439
    %472 = vst [vmem:[%s2 + $0xa0] sm:$0xff] %v440
    %473 = vst [vmem:[%s2 + $0xa8] sm:$0xff] %v441
    %474 = vst [vmem:[%s2 + $0xb0] sm:$0xff] %v442
    %475 = vst [vmem:[%s2 + $0xb8] sm:$0xff] %v443
    %476 = vst [vmem:[%s2 + $0xc0] sm:$0xff] %v444
    %477 = vst [vmem:[%s2 + $0xc8] sm:$0xff] %v445
    %478 = vst [vmem:[%s2 + $0xd0] sm:$0xff] %v446
    %479 = vst [vmem:[%s2 + $0xd8] sm:$0xff] %v447
    %480 = vst [vmem:[%s2 + $0xe0] sm:$0xff] %v448
    %481 = vst [vmem:[%s2 + $0xe8] sm:$0xff] %v449
    %482 = vst [vmem:[%s2 + $0xf0] sm:$0xff] %v450
    %483 = vst [vmem:[%s2 + $0xf8] sm:$0xff] %v451
  $region17: #{dmodule_forward.11} parent=0 // pred_fallthru
    _
  // Predicated region
  $region18: #{dmodule_forward.11} parent=0 // pred_check
    _
  $region19: #{dmodule_forward.11} parent=0 // pred_check_branch
    %485 = sbr.rel (0) target = $region21
  $region20: #{dmodule_forward.11} parent=0 // pred_region
    _
  $region21: #{dmodule_forward.11} parent=0 // pred_fallthru
    _
  // Predicated region
  $region22: #{dmodule_forward.11} parent=0 // pred_check
    _
  $region23: #{dmodule_forward.11} parent=0 // pred_check_branch
    %487 = sbr.rel (0) target = $region25
  $region24: #{dmodule_forward.11} parent=0 // pred_region
    _
  $region25: #{dmodule_forward.11} parent=0 // pred_fallthru
    _

// kernel: dmodule_forward.13
$region0: #{dmodule_forward.13}
  #allocation0 [shape = 'u32[]', space=smem, size = 0x4, offset = 0x4, fixed_abs, tag = 'smem constant byte address 0x4 - core index']
  #allocation1 [shape = 'u32[144,128]{1,0:T(1,128)}', space=vmem, size = 0x12000, scoped, tag = 'internal scratch']
  %s0 = inlined_call_operand.vmem [shape: bf16[8,128,81], index: 0, kind: input, shape index: {}]
  %s1 = inlined_call_operand.vmem [shape: bf16[8,81,4], index: 1, kind: input, shape index: {}]
  %s2 = inlined_call_operand.vmem [shape: f32[8,128,4], index: 2, kind: output, shape index: {}]
  %s3 = sld [smem:[#allocation0]]
  $region41: #{dmodule_forward.13} parent=0
    _
  %s5 = ssub.s32 1, %s3
  %s6 = scalar_select 0, %s5, %s3
  loop: start=0, step=1, limit=10
  $region2: #{dmodule_forward.13} parent=0 // loop_pre_header
    _
  $region3: #{dmodule_forward.13} parent=0 // loop_header
    %s8 = sphi 0, %s12
    %p9 = scmp.ge.s32.totalorder %s8, 10
    %s15 = sphi 0, %s27
    %s16 = sphi 0, %s23
    %s17 = sphi 0, %s15
    %s18 = sphi 0, %s16
    %s19 = sphi 0, %s17
    %s20 = sphi 0, %s18
    %s32 = sphi 0, %s34
    %s35 = sphi 0, %s32
    %s36 = sphi 0, %s35
    %s52 = sphi 0, %s36
    %s58 = sphi 0, %s60
    %s61 = sphi 0, %s58
    %s62 = sphi 0, %s61
    %s78 = sphi 0, %s62
    %s86 = sphi 0, %s88
    %s89 = sphi 0, %s86
    %s90 = sphi 0, %s89
    %s106 = sphi 0, %s90
  $region4: #{dmodule_forward.13} parent=0 // loop_header_branch
    %11 = sbr.rel (%p9) target = $region8
  $region5: #{dmodule_forward.13} parent=0 // loop_body
    %s13 = ssub.s32 %s8, 1
    %s14 = ssub.s32 %s8, 2
    %s21 = sadd.s32 1, %s16
    %p22 = scmp.ge.s32.totalorder %s21, 1
    %s23 = scalar_select %p22, 0, %s21
    %s24 = sadd.s32 1, %s15
    %s25 = scalar_select %p22, %s24, %s15
    %p26 = scmp.ge.s32.totalorder %s25, 8
    %s27 = scalar_select %p26, 0, %s25
    %s28 = ssub.s32 %s15, %s27
    %s29 = ssub.s32 %s16, %s23
    %s30 = sor.u32 %s28, %s29
    %p31 = scmp.eq.s32.totalorder %s30, 0
    %s33 = sadd.s32 %s32, 1
    %s34 = scalar_select %p31, %s32, %s33
    %p37 = pneg %p31
    %p38 = scmp.eq.s32.totalorder %s8, 7
    %p39 = por %p37, %p38
    %p40 = scmp.ne.s32.totalorder %s32, %s35
    %p41 = scmp.eq.s32.totalorder %s8, 0
    %p42 = por %p40, %p41
    %p43 = scmp.ne.s32.totalorder %s32, %s35
    %p44 = scmp.eq.s32.totalorder %s13, 7
    %p45 = por %p43, %p44
    %p46 = scmp.ne.s32.totalorder %s35, %s36
    %p47 = scmp.eq.s32.totalorder %s13, 0
    %p48 = por %p46, %p47
    %p49 = scmp.ne.s32.totalorder %s35, %s36
    %p50 = scmp.eq.s32.totalorder %s14, 7
    %p51 = por %p49, %p50
    %p53 = scmp.ne.s32.totalorder %s36, %s52
    %p54 = scmp.eq.s32.totalorder %s14, 0
    %p55 = por %p53, %p54
    %s56 = ssub.s32 %s15, %s27
    %p57 = scmp.eq.s32.totalorder %s56, 0
    %s59 = sadd.s32 %s58, 1
    %s60 = scalar_select %p57, %s58, %s59
    %p63 = pneg %p57
    %p64 = scmp.eq.s32.totalorder %s8, 7
    %p65 = por %p63, %p64
    %p66 = scmp.ne.s32.totalorder %s58, %s61
    %p67 = scmp.eq.s32.totalorder %s8, 0
    %p68 = por %p66, %p67
    %p69 = scmp.ne.s32.totalorder %s58, %s61
    %p70 = scmp.eq.s32.totalorder %s13, 7
    %p71 = por %p69, %p70
    %p72 = scmp.ne.s32.totalorder %s61, %s62
    %p73 = scmp.eq.s32.totalorder %s13, 0
    %p74 = por %p72, %p73
    %p75 = scmp.ne.s32.totalorder %s61, %s62
    %p76 = scmp.eq.s32.totalorder %s14, 7
    %p77 = por %p75, %p76
    %p79 = scmp.ne.s32.totalorder %s62, %s78
    %p80 = scmp.eq.s32.totalorder %s14, 0
    %p81 = por %p79, %p80
    %s82 = ssub.s32 %s15, %s27
    %s83 = ssub.s32 %s16, %s23
    %s84 = sor.u32 %s82, %s83
    %p85 = scmp.eq.s32.totalorder %s84, 0
    %s87 = sadd.s32 %s86, 1
    %s88 = scalar_select %p85, %s86, %s87
    %p91 = pneg %p85
    %p92 = scmp.eq.s32.totalorder %s8, 7
    %p93 = por %p91, %p92
    %p94 = scmp.ne.s32.totalorder %s86, %s89
    %p95 = scmp.eq.s32.totalorder %s8, 0
    %p96 = por %p94, %p95
    %p97 = scmp.ne.s32.totalorder %s86, %s89
    %p98 = scmp.eq.s32.totalorder %s13, 7
    %p99 = por %p97, %p98
    %p100 = scmp.ne.s32.totalorder %s89, %s90
    %p101 = scmp.eq.s32.totalorder %s13, 0
    %p102 = por %p100, %p101
    %p103 = scmp.ne.s32.totalorder %s89, %s90
    %p104 = scmp.eq.s32.totalorder %s14, 7
    %p105 = por %p103, %p104
    %p107 = scmp.ne.s32.totalorder %s90, %s106
    %p108 = scmp.eq.s32.totalorder %s14, 0
    %p109 = por %p107, %p108
    %p110 = scmp.le.s32.totalorder 1, %s8
    %p111 = scmp.lt.s32.totalorder %s8, 9
    %p112 = pnand %p110, %p111
    %p113 = pneg %p112
    // Predicated region
    $region9: #{dmodule_forward.13} parent=5 // pred_check
      _
    $region10: #{dmodule_forward.13} parent=5 // pred_check_branch
      %115 = sbr.rel (%p112) target = $region12
    $region11: #{dmodule_forward.13} parent=5 // pred_region
      %s116 = ssub.s32 %s8, 1
    $region12: #{dmodule_forward.13} parent=5 // pred_fallthru
      _
    %p117 = scmp.lt.s32.totalorder %s8, 8
    // Predicated region
    $region13: #{dmodule_forward.13} parent=5 // pred_check
      %p118 = pneg %p117
    $region14: #{dmodule_forward.13} parent=5 // pred_check_branch
      %120 = sbr.rel (%p118) target = $region16
    $region15: #{dmodule_forward.13} parent=5 // pred_region
      // Predicated region
      $region17: #{dmodule_forward.13} parent=15 // pred_check
        %p121 = pneg %p42
      $region18: #{dmodule_forward.13} parent=15 // pred_check_branch
        %123 = sbr.rel (%p121) target = $region20
      $region19: #{dmodule_forward.13} parent=15 // pred_region
        %s124 = smul.u32 16, %s16
        %p125 = scmp.lt.s32.totalorder %s15, 7
        %s126 = scalar_select %p125, %s15, 7
        %p127 = scmp.lt.s32.totalorder %s124, 15
        %s128 = scalar_select %p127, %s124, 15
        %s129 = smul.addr %s126, 16
        %s130 = sadd.s32 %s128, %s129
        %s131 = smul.addr %s130, 4
        %s132 = scalar_lea.vmem %s0, %s131
        %s133 = smul.u32 16, %s16
      $region20: #{dmodule_forward.13} parent=15 // pred_fallthru
        _
      // Predicated region
      $region21: #{dmodule_forward.13} parent=15 // pred_check
        %p134 = pneg %p68
      $region22: #{dmodule_forward.13} parent=15 // pred_check_branch
        %136 = sbr.rel (%p134) target = $region24
      $region23: #{dmodule_forward.13} parent=15 // pred_region
        %p137 = scmp.lt.s32.totalorder %s15, 7
        %s138 = scalar_select %p137, %s15, 7
        %s139 = smul.addr %s138, 11
        %s140 = smul.addr %s139, 4
        %s141 = scalar_lea.vmem %s1, %s140
      $region24: #{dmodule_forward.13} parent=15 // pred_fallthru
        _
    $region16: #{dmodule_forward.13} parent=5 // pred_fallthru
      _
    %p142 = scmp.le.s32.totalorder 1, %s8
    %p143 = scmp.lt.s32.totalorder %s8, 9
    %p144 = pnand %p142, %p143
    %p145 = pneg %p144
    // Predicated region
    $region25: #{dmodule_forward.13} parent=5 // pred_check
      _
    $region26: #{dmodule_forward.13} parent=5 // pred_check_branch
      %147 = sbr.rel (%p144) target = $region28
    $region27: #{dmodule_forward.13} parent=5 // pred_region
      %s148 = ssub.s32 %s8, 1
      %s149 = smul.u32 16, %s18
      %p150 = scmp.lt.s32.totalorder %s17, 7
      %s151 = scalar_select %p150, %s17, 7
      %p152 = scmp.lt.s32.totalorder %s149, 15
      %s153 = scalar_select %p152, %s149, 15
      %s154 = smul.addr %s151, 16
      %s155 = sadd.s32 %s153, %s154
      %s156 = smul.addr %s155, 4
      %s157 = scalar_lea.vmem %s0, %s156
      %p158 = pneg %p48
      %p159 = pneg %p45
      %p160 = scmp.lt.s32.totalorder %s17, 7
      %s161 = scalar_select %p160, %s17, 7
      %s162 = smul.addr %s161, 11
      %s163 = smul.addr %s162, 4
      %s164 = scalar_lea.vmem %s1, %s163
      %p165 = pneg %p74
      %p166 = pneg %p71
      %p167 = pneg %p102
      %p168 = pneg %p99
      %s169 = smul.u32 16, %s18
      %p170 = scmp.lt.s32.totalorder %s17, 7
      %s171 = scalar_select %p170, %s17, 7
      %p172 = scmp.lt.s32.totalorder %s169, 15
      %s173 = scalar_select %p172, %s169, 15
      %s174 = smul.addr %s171, 16
      %s175 = sadd.s32 %s173, %s174
      %s176 = smul.addr %s175, 8
      %s177 = scalar_lea.vmem %s2, %s176
      %s178 = smul.u32 16, %s18
      %p179 = scmp.lt.s32.totalorder %s17, 7
      %s180 = scalar_select %p179, %s17, 7
      %p181 = scmp.lt.s32.totalorder %s178, 15
      %s182 = scalar_select %p181, %s178, 15
      %s183 = smul.addr %s180, 16
      %s184 = sadd.s32 %s182, %s183
      %s185 = smul.addr %s184, 4
      %s186 = scalar_lea.vmem %s0, %s185
      %s187 = smul.u32 16, %s18
      %p188 = scmp.lt.s32.totalorder %s17, 7
      %s189 = scalar_select %p188, %s17, 7
      %s190 = smul.addr %s189, 11
      %s191 = smul.addr %s190, 4
      %s192 = scalar_lea.vmem %s1, %s191
      %s193 = smul.u32 16, %s18
      %p194 = scmp.lt.s32.totalorder %s17, 7
      %s195 = scalar_select %p194, %s17, 7
      %p196 = scmp.lt.s32.totalorder %s193, 15
      %s197 = scalar_select %p196, %s193, 15
      %s198 = smul.addr %s195, 16
      %s199 = sadd.s32 %s197, %s198
      %s200 = smul.addr %s199, 8
      %s201 = scalar_lea.vmem %s2, %s200
      %s202 = smul.u32 16, %s18
      %v204 = vld [vmem:[%s186] sm:$0xf]
      %v205 = vld [vmem:[%s186 + $0x4] sm:$0xf]
      %v206 = vld [vmem:[%s186 + $0x8] sm:$0xf]
      %v207 = vld [vmem:[%s186 + $0xc] sm:$0xf]
      %v208 = vld [vmem:[%s186 + $0x10] sm:$0xf]
      %v209 = vld [vmem:[%s186 + $0x14] sm:$0xf]
      %v210 = vld [vmem:[%s186 + $0x18] sm:$0xf]
      %v211 = vld [vmem:[%s186 + $0x1c] sm:$0xf]
      %v212 = vld [vmem:[%s186 + $0x20] sm:$0xf]
      %v213 = vld [vmem:[%s186 + $0x24] sm:$0xf]
      %v214 = vld [vmem:[%s186 + $0x28] sm:$0xf]
      %v215 = vld [vmem:[%s186 + $0x2c] sm:$0xf]
      %v216 = vld [vmem:[%s186 + $0x30] sm:$0xf]
      %v217 = vld [vmem:[%s186 + $0x34] sm:$0xf]
      %v218 = vld [vmem:[%s186 + $0x38] sm:$0xf]
      %v219 = vld [vmem:[%s186 + $0x3c] sm:$0xf]
      %v220 = vld [vmem:[%s192] sm:$0xf]
      %v221 = vld [vmem:[%s192 + $0x4] sm:$0xf]
      %v222 = vld [vmem:[%s192 + $0x8] sm:$0xf]
      %v223 = vld [vmem:[%s192 + $0xc] sm:$0xf]
      %v224 = vld [vmem:[%s192 + $0x10] sm:$0xf]
      %v225 = vld [vmem:[%s192 + $0x14] sm:$0xf]
      %v226 = vld [vmem:[%s192 + $0x18] sm:$0xf]
      %v227 = vld [vmem:[%s192 + $0x1c] sm:$0xf]
      %v228 = vld [vmem:[%s192 + $0x20] sm:$0xf]
      %v229 = vld [vmem:[%s192 + $0x24] sm:$0xf]
      %v230 = vld [vmem:[%s192 + $0x28] sm:$0x1]
      %v247 = vunpack.c.l.b16 %v204
      %v248 = vunpack.c.l.b16 %v205
      %v249 = vunpack.c.l.b16 %v206
      %v250 = vunpack.c.l.b16 %v207
      %v251 = vunpack.c.l.b16 %v208
      %v252 = vunpack.c.l.b16 %v209
      %v253 = vunpack.c.l.b16 %v210
      %v254 = vunpack.c.l.b16 %v211
      %v255 = vunpack.c.l.b16 %v212
      %v256 = vunpack.c.l.b16 %v213
      %v257 = vunpack.c.l.b16 %v214
      %v258 = vunpack.c.l.b16 %v215
      %v259 = vunpack.c.l.b16 %v216
      %v260 = vunpack.c.l.b16 %v217
      %v261 = vunpack.c.l.b16 %v218
      %v262 = vunpack.c.l.b16 %v219
      %v263 = vpack.c.b16 %v248, %v247
      %v264 = vpack.c.b16 %v250, %v249
      %v265 = vpack.c.b16 %v252, %v251
      %v266 = vpack.c.b16 %v254, %v253
      %v267 = vpack.c.b16 %v256, %v255
      %v268 = vpack.c.b16 %v258, %v257
      %v269 = vpack.c.b16 %v260, %v259
      %v270 = vpack.c.b16 %v262, %v261
      %v282 = vunpack.c.l.b16 %v220
      %v283 = vunpack.c.l.b16 %v221
      %v284 = vunpack.c.l.b16 %v222
      %v285 = vunpack.c.l.b16 %v223
      %v286 = vunpack.c.l.b16 %v224
      %v287 = vunpack.c.l.b16 %v225
      %v288 = vunpack.c.l.b16 %v226
      %v289 = vunpack.c.l.b16 %v227
      %v290 = vunpack.c.l.b16 %v228
      %v291 = vunpack.c.l.b16 %v229
      %v292 = vunpack.c.l.b16 %v230
      %v293 = vpack.c.b16 %v283, %v282
      %v294 = vpack.c.b16 %v285, %v284
      %v295 = vpack.c.b16 %v287, %v286
      %v296 = vpack.c.b16 %v289, %v288
      %v297 = vpack.c.b16 %v291, %v290
      %v298 = vpack.c.b16 %v292, %v292
      %vm304 = vcmask 662528
      %v306 = vsel %vm304, %v263, 0
      %v309 = vsel %vm304, %v264, 0
      %v312 = vsel %vm304, %v265, 0
      %v315 = vsel %vm304, %v266, 0
      %v318 = vsel %vm304, %v267, 0
      %v321 = vsel %vm304, %v268, 0
      %v324 = vsel %vm304, %v269, 0
      %v327 = vsel %vm304, %v270, 0
      %vm329 = vcmask 1040384
      %v330 = vsel 0, 4294967295, 65535
      %v331 = vsel %vm329, %v330, 0
      %v333 = vand.u32 %v298, %v331
      %335 = vmatprep.subr.bf16.mxu0 0
      %336 = vmatpush1.bf16.msra.mxu0 %v293
      %337 = vmatprep.subr.bf16.mxu0 0
      %338 = vmatpush1.bf16.msra.mxu0 %v294
      %339 = vmatprep.subr.bf16.mxu0 0
      %340 = vmatpush1.bf16.msra.mxu0 %v295
      %341 = vmatprep.subr.bf16.mxu0 0
      %342 = vmatpush1.bf16.msra.mxu0 %v296
      %343 = vmatprep.subr.bf16.mxu0 0
      %344 = vmatpush1.bf16.msra.mxu0 %v297
      %345 = vmatprep.subr.bf16.mxu0 0
      %346 = vmatpush1.bf16.msra.mxu0 %v333
      %347 = vmatprep.subr.bf16.mxu0 0
      %348 = vmatpush1.bf16.msra.mxu0 0
      %349 = vmatprep.subr.bf16.mxu0 0
      %350 = vmatpush1.bf16.msra.mxu0 0
      %351 = vmatprep.subr.bf16.mxu0 0
      %352 = vmatpush1.bf16.msra.mxu0 0
      %353 = vmatprep.subr.bf16.mxu0 0
      %354 = vmatpush1.bf16.msra.mxu0 0
      %355 = vmatprep.subr.bf16.mxu0 0
      %356 = vmatpush1.bf16.msra.mxu0 0
      %357 = vmatprep.subr.bf16.mxu0 0
      %358 = vmatpush1.bf16.msra.mxu0 0
      %359 = vmatprep.subr.bf16.mxu0 0
      %360 = vmatpush1.bf16.msra.mxu0 0
      %361 = vmatprep.subr.bf16.mxu0 0
      %362 = vmatpush1.bf16.msra.mxu0 0
      %363 = vmatprep.subr.bf16.mxu0 0
      %364 = vmatpush1.bf16.msra.mxu0 0
      %365 = vmatprep.subr.bf16.mxu0 0
      %366 = vmatpush1.bf16.msra.mxu0 0
      %367 = vmatprep.mubr.bf16.mxu0 0
      %368 = vmatmul.mubr.bf16.gmra.mrb[0].mxu0 %v306
      %v369 = vpop.f32.mrb[0].mxu0
      %v370 = vadd.f32 0.0, %v369
      %v371 = vpop.f32.mrb[0].mxu0
      %v372 = vpop.f32.mrb[0].mxu0
      %v373 = vadd.f32 0.0, %v372
      %v374 = vpop.f32.mrb[0].mxu0
      %375 = vmatprep.mubr.bf16.mxu0 0
      %376 = vmatmul.mubr.bf16.gmra.mrb[0].mxu0 %v309
      %v377 = vpop.f32.mrb[0].mxu0
      %v378 = vadd.f32 0.0, %v377
      %v379 = vpop.f32.mrb[0].mxu0
      %v380 = vpop.f32.mrb[0].mxu0
      %v381 = vadd.f32 0.0, %v380
      %v382 = vpop.f32.mrb[0].mxu0
      %383 = vmatprep.mubr.bf16.mxu0 0
      %384 = vmatmul.mubr.bf16.gmra.mrb[0].mxu0 %v312
      %v385 = vpop.f32.mrb[0].mxu0
      %v386 = vadd.f32 0.0, %v385
      %v387 = vpop.f32.mrb[0].mxu0
      %v388 = vpop.f32.mrb[0].mxu0
      %v389 = vadd.f32 0.0, %v388
      %v390 = vpop.f32.mrb[0].mxu0
      %391 = vmatprep.mubr.bf16.mxu0 0
      %392 = vmatmul.mubr.bf16.gmra.mrb[0].mxu0 %v315
      %v393 = vpop.f32.mrb[0].mxu0
      %v394 = vadd.f32 0.0, %v393
      %v395 = vpop.f32.mrb[0].mxu0
      %v396 = vpop.f32.mrb[0].mxu0
      %v397 = vadd.f32 0.0, %v396
      %v398 = vpop.f32.mrb[0].mxu0
      %399 = vmatprep.mubr.bf16.mxu0 0
      %400 = vmatmul.mubr.bf16.gmra.mrb[0].mxu0 %v318
      %v401 = vpop.f32.mrb[0].mxu0
      %v402 = vadd.f32 0.0, %v401
      %v403 = vpop.f32.mrb[0].mxu0
      %v404 = vpop.f32.mrb[0].mxu0
      %v405 = vadd.f32 0.0, %v404
      %v406 = vpop.f32.mrb[0].mxu0
      %407 = vmatprep.mubr.bf16.mxu0 0
      %408 = vmatmul.mubr.bf16.gmra.mrb[0].mxu0 %v321
      %v409 = vpop.f32.mrb[0].mxu0
      %v410 = vadd.f32 0.0, %v409
      %v411 = vpop.f32.mrb[0].mxu0
      %v412 = vpop.f32.mrb[0].mxu0
      %v413 = vadd.f32 0.0, %v412
      %v414 = vpop.f32.mrb[0].mxu0
      %415 = vmatprep.mubr.bf16.mxu0 0
      %416 = vmatmul.mubr.bf16.gmra.mrb[0].mxu0 %v324
      %v417 = vpop.f32.mrb[0].mxu0
      %v418 = vadd.f32 0.0, %v417
      %v419 = vpop.f32.mrb[0].mxu0
      %v420 = vpop.f32.mrb[0].mxu0
      %v421 = vadd.f32 0.0, %v420
      %v422 = vpop.f32.mrb[0].mxu0
      %423 = vmatprep.mubr.bf16.mxu0 0
      %424 = vmatmul.mubr.bf16.gmra.mrb[0].mxu0 %v327
      %v425 = vpop.f32.mrb[0].mxu0
      %v426 = vadd.f32 0.0, %v425
      %v427 = vpop.f32.mrb[0].mxu0
      %v428 = vpop.f32.mrb[0].mxu0
      %v429 = vadd.f32 0.0, %v428
      %v430 = vpop.f32.mrb[0].mxu0
      %431 = vdwg.mxu0
      %vm432 = vcmask 31744
      %433 = vst.msk [vmem:[%s201] sm:$0xff] %vm432, %v370
      %434 = vst.msk [vmem:[%s201 + $0x8] sm:$0xff] %vm432, %v373
      %435 = vst.msk [vmem:[%s201 + $0x10] sm:$0xff] %vm432, %v378
      %436 = vst.msk [vmem:[%s201 + $0x18] sm:$0xff] %vm432, %v381
      %437 = vst.msk [vmem:[%s201 + $0x20] sm:$0xff] %vm432, %v386
      %438 = vst.msk [vmem:[%s201 + $0x28] sm:$0xff] %vm432, %v389
      %439 = vst.msk [vmem:[%s201 + $0x30] sm:$0xff] %vm432, %v394
      %440 = vst.msk [vmem:[%s201 + $0x38] sm:$0xff] %vm432, %v397
      %441 = vst.msk [vmem:[%s201 + $0x40] sm:$0xff] %vm432, %v402
      %442 = vst.msk [vmem:[%s201 + $0x48] sm:$0xff] %vm432, %v405
      %443 = vst.msk [vmem:[%s201 + $0x50] sm:$0xff] %vm432, %v410
      %444 = vst.msk [vmem:[%s201 + $0x58] sm:$0xff] %vm432, %v413
      %445 = vst.msk [vmem:[%s201 + $0x60] sm:$0xff] %vm432, %v418
      %446 = vst.msk [vmem:[%s201 + $0x68] sm:$0xff] %vm432, %v421
      %447 = vst.msk [vmem:[%s201 + $0x70] sm:$0xff] %vm432, %v426
      %448 = vst.msk [vmem:[%s201 + $0x78] sm:$0xff] %vm432, %v429
      %s449 = smul.u32 16, %s18
      %p450 = scmp.lt.s32.totalorder %s17, 7
      %s451 = scalar_select %p450, %s17, 7
      %p452 = scmp.lt.s32.totalorder %s449, 15
      %s453 = scalar_select %p452, %s449, 15
      %s454 = smul.addr %s451, 16
      %s455 = sadd.s32 %s453, %s454
      %s456 = smul.addr %s455, 8
      %s457 = scalar_lea.vmem %s2, %s456
      // Predicated region
      $region29: #{dmodule_forward.13} parent=27 // pred_check
        %p458 = pneg %p99
      $region30: #{dmodule_forward.13} parent=27 // pred_check_branch
        %460 = sbr.rel (%p458) target = $region32
      $region31: #{dmodule_forward.13} parent=27 // pred_region
        %s461 = smul.u32 16, %s18
      $region32: #{dmodule_forward.13} parent=27 // pred_fallthru
        _
    $region28: #{dmodule_forward.13} parent=5 // pred_fallthru
      _
    %p462 = scmp.le.s32.totalorder 2, %s8
    // Predicated region
    $region33: #{dmodule_forward.13} parent=5 // pred_check
      %p463 = pneg %p462
    $region34: #{dmodule_forward.13} parent=5 // pred_check_branch
      %465 = sbr.rel (%p463) target = $region36
    $region35: #{dmodule_forward.13} parent=5 // pred_region
      %s466 = ssub.s32 %s8, 2
      // Predicated region
      $region37: #{dmodule_forward.13} parent=35 // pred_check
        %p467 = pneg %p105
      $region38: #{dmodule_forward.13} parent=35 // pred_check_branch
        %469 = sbr.rel (%p467) target = $region40
      $region39: #{dmodule_forward.13} parent=35 // pred_region
        %s470 = smul.u32 16, %s20
        %p471 = scmp.lt.s32.totalorder %s19, 7
        %s472 = scalar_select %p471, %s19, 7
        %p473 = scmp.lt.s32.totalorder %s470, 15
        %s474 = scalar_select %p473, %s470, 15
        %s475 = smul.addr %s472, 16
        %s476 = sadd.s32 %s474, %s475
        %s477 = smul.addr %s476, 8
        %s478 = scalar_lea.vmem %s2, %s477
      $region40: #{dmodule_forward.13} parent=35 // pred_fallthru
        _
    $region36: #{dmodule_forward.13} parent=5 // pred_fallthru
      _
  $region6: #{dmodule_forward.13} parent=0 // loop_footer
    %s12 = sadd.s32 1, %s8
  $region7: #{dmodule_forward.13} parent=0 // loop_footer_branch
    %7 = sbr.rel target = $region3
  $region8: #{dmodule_forward.13} parent=0 // loop_exit
    _

// kernel: dmodule_forward.9
$region0: #{dmodule_forward.9}
  #allocation0 [shape = 'u32[]', space=smem, size = 0x4, offset = 0x4, fixed_abs, tag = 'smem constant byte address 0x4 - core index']
  #allocation1 [shape = 'u32[144,128]{1,0:T(1,128)}', space=vmem, size = 0x12000, scoped, tag = 'internal scratch']
  %s0 = inlined_call_operand.vmem [shape: f32[8,8,64], index: 0, kind: input, shape index: {}]
  %s1 = inlined_call_operand.vmem [shape: f32[8,8,49,64], index: 1, kind: input, shape index: {}]
  %s2 = inlined_call_operand.vmem [shape: f32[8,8,49,64], index: 2, kind: input, shape index: {}]
  %s3 = inlined_call_operand.vmem [shape: f32[8,49,64], index: 3, kind: input, shape index: {}]
  %s4 = inlined_call_operand.vmem [shape: f32[8,8,64], index: 4, kind: output, shape index: {}]
  %s5 = sld [smem:[#allocation0]]
  $region49: #{dmodule_forward.9} parent=0
    _
  %s7 = ssub.s32 1, %s5
  %s8 = scalar_select 0, %s7, %s5
  loop: start=0, step=1, limit=10
  $region2: #{dmodule_forward.9} parent=0 // loop_pre_header
    _
  $region3: #{dmodule_forward.9} parent=0 // loop_header
    %s10 = sphi 0, %s14
    %p11 = scmp.ge.s32.totalorder %s10, 10
    %s17 = sphi 0, %s29
    %s18 = sphi 0, %s25
    %s19 = sphi 0, %s17
    %s20 = sphi 0, %s18
    %s21 = sphi 0, %s19
    %s22 = sphi 0, %s20
    %s34 = sphi 0, %s36
    %s37 = sphi 0, %s34
    %s38 = sphi 0, %s37
    %s54 = sphi 0, %s38
    %s62 = sphi 0, %s64
    %s65 = sphi 0, %s62
    %s66 = sphi 0, %s65
    %s82 = sphi 0, %s66
    %s90 = sphi 0, %s92
    %s93 = sphi 0, %s90
    %s94 = sphi 0, %s93
    %s110 = sphi 0, %s94
    %s116 = sphi 0, %s118
    %s119 = sphi 0, %s116
    %s120 = sphi 0, %s119
    %s136 = sphi 0, %s120
    %s144 = sphi 0, %s146
    %s147 = sphi 0, %s144
    %s148 = sphi 0, %s147
    %s164 = sphi 0, %s148
  $region4: #{dmodule_forward.9} parent=0 // loop_header_branch
    %13 = sbr.rel (%p11) target = $region8
  $region5: #{dmodule_forward.9} parent=0 // loop_body
    %s15 = ssub.s32 %s10, 1
    %s16 = ssub.s32 %s10, 2
    %s23 = sadd.s32 1, %s18
    %p24 = scmp.ge.s32.totalorder %s23, 1
    %s25 = scalar_select %p24, 0, %s23
    %s26 = sadd.s32 1, %s17
    %s27 = scalar_select %p24, %s26, %s17
    %p28 = scmp.ge.s32.totalorder %s27, 8
    %s29 = scalar_select %p28, 0, %s27
    %s30 = ssub.s32 %s17, %s29
    %s31 = ssub.s32 %s18, %s25
    %s32 = sor.u32 %s30, %s31
    %p33 = scmp.eq.s32.totalorder %s32, 0
    %s35 = sadd.s32 %s34, 1
    %s36 = scalar_select %p33, %s34, %s35
    %p39 = pneg %p33
    %p40 = scmp.eq.s32.totalorder %s10, 7
    %p41 = por %p39, %p40
    %p42 = scmp.ne.s32.totalorder %s34, %s37
    %p43 = scmp.eq.s32.totalorder %s10, 0
    %p44 = por %p42, %p43
    %p45 = scmp.ne.s32.totalorder %s34, %s37
    %p46 = scmp.eq.s32.totalorder %s15, 7
    %p47 = por %p45, %p46
    %p48 = scmp.ne.s32.totalorder %s37, %s38
    %p49 = scmp.eq.s32.totalorder %s15, 0
    %p50 = por %p48, %p49
    %p51 = scmp.ne.s32.totalorder %s37, %s38
    %p52 = scmp.eq.s32.totalorder %s16, 7
    %p53 = por %p51, %p52
    %p55 = scmp.ne.s32.totalorder %s38, %s54
    %p56 = scmp.eq.s32.totalorder %s16, 0
    %p57 = por %p55, %p56
    %s58 = ssub.s32 %s17, %s29
    %s59 = ssub.s32 %s18, %s25
    %s60 = sor.u32 %s58, %s59
    %p61 = scmp.eq.s32.totalorder %s60, 0
    %s63 = sadd.s32 %s62, 1
    %s64 = scalar_select %p61, %s62, %s63
    %p67 = pneg %p61
    %p68 = scmp.eq.s32.totalorder %s10, 7
    %p69 = por %p67, %p68
    %p70 = scmp.ne.s32.totalorder %s62, %s65
    %p71 = scmp.eq.s32.totalorder %s10, 0
    %p72 = por %p70, %p71
    %p73 = scmp.ne.s32.totalorder %s62, %s65
    %p74 = scmp.eq.s32.totalorder %s15, 7
    %p75 = por %p73, %p74
    %p76 = scmp.ne.s32.totalorder %s65, %s66
    %p77 = scmp.eq.s32.totalorder %s15, 0
    %p78 = por %p76, %p77
    %p79 = scmp.ne.s32.totalorder %s65, %s66
    %p80 = scmp.eq.s32.totalorder %s16, 7
    %p81 = por %p79, %p80
    %p83 = scmp.ne.s32.totalorder %s66, %s82
    %p84 = scmp.eq.s32.totalorder %s16, 0
    %p85 = por %p83, %p84
    %s86 = ssub.s32 %s17, %s29
    %s87 = ssub.s32 %s18, %s25
    %s88 = sor.u32 %s86, %s87
    %p89 = scmp.eq.s32.totalorder %s88, 0
    %s91 = sadd.s32 %s90, 1
    %s92 = scalar_select %p89, %s90, %s91
    %p95 = pneg %p89
    %p96 = scmp.eq.s32.totalorder %s10, 7
    %p97 = por %p95, %p96
    %p98 = scmp.ne.s32.totalorder %s90, %s93
    %p99 = scmp.eq.s32.totalorder %s10, 0
    %p100 = por %p98, %p99
    %p101 = scmp.ne.s32.totalorder %s90, %s93
    %p102 = scmp.eq.s32.totalorder %s15, 7
    %p103 = por %p101, %p102
    %p104 = scmp.ne.s32.totalorder %s93, %s94
    %p105 = scmp.eq.s32.totalorder %s15, 0
    %p106 = por %p104, %p105
    %p107 = scmp.ne.s32.totalorder %s93, %s94
    %p108 = scmp.eq.s32.totalorder %s16, 7
    %p109 = por %p107, %p108
    %p111 = scmp.ne.s32.totalorder %s94, %s110
    %p112 = scmp.eq.s32.totalorder %s16, 0
    %p113 = por %p111, %p112
    %s114 = ssub.s32 %s18, %s25
    %p115 = scmp.eq.s32.totalorder %s114, 0
    %s117 = sadd.s32 %s116, 1
    %s118 = scalar_select %p115, %s116, %s117
    %p121 = pneg %p115
    %p122 = scmp.eq.s32.totalorder %s10, 7
    %p123 = por %p121, %p122
    %p124 = scmp.ne.s32.totalorder %s116, %s119
    %p125 = scmp.eq.s32.totalorder %s10, 0
    %p126 = por %p124, %p125
    %p127 = scmp.ne.s32.totalorder %s116, %s119
    %p128 = scmp.eq.s32.totalorder %s15, 7
    %p129 = por %p127, %p128
    %p130 = scmp.ne.s32.totalorder %s119, %s120
    %p131 = scmp.eq.s32.totalorder %s15, 0
    %p132 = por %p130, %p131
    %p133 = scmp.ne.s32.totalorder %s119, %s120
    %p134 = scmp.eq.s32.totalorder %s16, 7
    %p135 = por %p133, %p134
    %p137 = scmp.ne.s32.totalorder %s120, %s136
    %p138 = scmp.eq.s32.totalorder %s16, 0
    %p139 = por %p137, %p138
    %s140 = ssub.s32 %s17, %s29
    %s141 = ssub.s32 %s18, %s25
    %s142 = sor.u32 %s140, %s141
    %p143 = scmp.eq.s32.totalorder %s142, 0
    %s145 = sadd.s32 %s144, 1
    %s146 = scalar_select %p143, %s144, %s145
    %p149 = pneg %p143
    %p150 = scmp.eq.s32.totalorder %s10, 7
    %p151 = por %p149, %p150
    %p152 = scmp.ne.s32.totalorder %s144, %s147
    %p153 = scmp.eq.s32.totalorder %s10, 0
    %p154 = por %p152, %p153
    %p155 = scmp.ne.s32.totalorder %s144, %s147
    %p156 = scmp.eq.s32.totalorder %s15, 7
    %p157 = por %p155, %p156
    %p158 = scmp.ne.s32.totalorder %s147, %s148
    %p159 = scmp.eq.s32.totalorder %s15, 0
    %p160 = por %p158, %p159
    %p161 = scmp.ne.s32.totalorder %s147, %s148
    %p162 = scmp.eq.s32.totalorder %s16, 7
    %p163 = por %p161, %p162
    %p165 = scmp.ne.s32.totalorder %s148, %s164
    %p166 = scmp.eq.s32.totalorder %s16, 0
    %p167 = por %p165, %p166
    %p168 = scmp.le.s32.totalorder 1, %s10
    %p169 = scmp.lt.s32.totalorder %s10, 9
    %p170 = pnand %p168, %p169
    %p171 = pneg %p170
    // Predicated region
    $region9: #{dmodule_forward.9} parent=5 // pred_check
      _
    $region10: #{dmodule_forward.9} parent=5 // pred_check_branch
      %173 = sbr.rel (%p170) target = $region12
    $region11: #{dmodule_forward.9} parent=5 // pred_region
      %s174 = ssub.s32 %s10, 1
      // Predicated region
      $region13: #{dmodule_forward.9} parent=11 // pred_check
        %p175 = pneg %p132
      $region14: #{dmodule_forward.9} parent=11 // pred_check_branch
        %177 = sbr.rel (%p175) target = $region16
      $region15: #{dmodule_forward.9} parent=11 // pred_region
        %p178 = scmp.lt.s32.totalorder %s20, 0
        %s179 = scalar_select %p178, %s20, 0
        %s180 = smul.addr %s179, 8
        %s181 = scalar_lea.vmem %s3, %s180
      $region16: #{dmodule_forward.9} parent=11 // pred_fallthru
        _
    $region12: #{dmodule_forward.9} parent=5 // pred_fallthru
      _
    %p182 = scmp.lt.s32.totalorder %s10, 8
    // Predicated region
    $region17: #{dmodule_forward.9} parent=5 // pred_check
      %p183 = pneg %p182
    $region18: #{dmodule_forward.9} parent=5 // pred_check_branch
      %185 = sbr.rel (%p183) target = $region20
    $region19: #{dmodule_forward.9} parent=5 // pred_region
      // Predicated region
      $region21: #{dmodule_forward.9} parent=19 // pred_check
        %p186 = pneg %p44
      $region22: #{dmodule_forward.9} parent=19 // pred_check_branch
        %188 = sbr.rel (%p186) target = $region24
      $region23: #{dmodule_forward.9} parent=19 // pred_region
        %p189 = scmp.lt.s32.totalorder %s17, 7
        %s190 = scalar_select %p189, %s17, 7
        %p191 = scmp.lt.s32.totalorder %s18, 0
        %s192 = scalar_select %p191, %s18, 0
        %s193 = sadd.s32 %s192, %s190
        %s194 = smul.addr %s193, 8
        %s195 = scalar_lea.vmem %s0, %s194
      $region24: #{dmodule_forward.9} parent=19 // pred_fallthru
        _
      // Predicated region
      $region25: #{dmodule_forward.9} parent=19 // pred_check
        %p196 = pneg %p72
      $region26: #{dmodule_forward.9} parent=19 // pred_check_branch
        %198 = sbr.rel (%p196) target = $region28
      $region27: #{dmodule_forward.9} parent=19 // pred_region
        %p199 = scmp.lt.s32.totalorder %s17, 7
        %s200 = scalar_select %p199, %s17, 7
        %p201 = scmp.lt.s32.totalorder %s18, 0
        %s202 = scalar_select %p201, %s18, 0
        %s203 = smul.addr %s200, 56
        %s204 = sadd.s32 %s202, %s203
        %s205 = smul.addr %s204, 8
        %s206 = scalar_lea.vmem %s1, %s205
      $region28: #{dmodule_forward.9} parent=19 // pred_fallthru
        _
      // Predicated region
      $region29: #{dmodule_forward.9} parent=19 // pred_check
        %p207 = pneg %p100
      $region30: #{dmodule_forward.9} parent=19 // pred_check_branch
        %209 = sbr.rel (%p207) target = $region32
      $region31: #{dmodule_forward.9} parent=19 // pred_region
        %p210 = scmp.lt.s32.totalorder %s17, 7
        %s211 = scalar_select %p210, %s17, 7
        %p212 = scmp.lt.s32.totalorder %s18, 0
        %s213 = scalar_select %p212, %s18, 0
        %s214 = smul.addr %s211, 56
        %s215 = sadd.s32 %s213, %s214
        %s216 = smul.addr %s215, 8
        %s217 = scalar_lea.vmem %s2, %s216
      $region32: #{dmodule_forward.9} parent=19 // pred_fallthru
        _
    $region20: #{dmodule_forward.9} parent=5 // pred_fallthru
      _
    %p218 = scmp.le.s32.totalorder 1, %s10
    %p219 = scmp.lt.s32.totalorder %s10, 9
    %p220 = pnand %p218, %p219
    %p221 = pneg %p220
    // Predicated region
    $region33: #{dmodule_forward.9} parent=5 // pred_check
      _
    $region34: #{dmodule_forward.9} parent=5 // pred_check_branch
      %223 = sbr.rel (%p220) target = $region36
    $region35: #{dmodule_forward.9} parent=5 // pred_region
      %s224 = ssub.s32 %s10, 1
      %p225 = scmp.lt.s32.totalorder %s19, 7
      %s226 = scalar_select %p225, %s19, 7
      %p227 = scmp.lt.s32.totalorder %s20, 0
      %s228 = scalar_select %p227, %s20, 0
      %s229 = sadd.s32 %s228, %s226
      %s230 = smul.addr %s229, 8
      %s231 = scalar_lea.vmem %s0, %s230
      %p232 = pneg %p50
      %p233 = pneg %p47
      %p234 = scmp.lt.s32.totalorder %s19, 7
      %s235 = scalar_select %p234, %s19, 7
      %p236 = scmp.lt.s32.totalorder %s20, 0
      %s237 = scalar_select %p236, %s20, 0
      %s238 = smul.addr %s235, 56
      %s239 = sadd.s32 %s237, %s238
      %s240 = smul.addr %s239, 8
      %s241 = scalar_lea.vmem %s1, %s240
      %p242 = pneg %p78
      %p243 = pneg %p75
      %p244 = scmp.lt.s32.totalorder %s19, 7
      %s245 = scalar_select %p244, %s19, 7
      %p246 = scmp.lt.s32.totalorder %s20, 0
      %s247 = scalar_select %p246, %s20, 0
      %s248 = smul.addr %s245, 56
      %s249 = sadd.s32 %s247, %s248
      %s250 = smul.addr %s249, 8
      %s251 = scalar_lea.vmem %s2, %s250
      %p252 = pneg %p106
      %p253 = pneg %p103
      %p254 = scmp.lt.s32.totalorder %s20, 0
      %s255 = scalar_select %p254, %s20, 0
      %s256 = smul.addr %s255, 8
      %s257 = scalar_lea.vmem %s3, %s256
      %p258 = pneg %p132
      %p259 = pneg %p129
      %p260 = pneg %p160
      %p261 = pneg %p157
      %p262 = scmp.lt.s32.totalorder %s19, 7
      %s263 = scalar_select %p262, %s19, 7
      %p264 = scmp.lt.s32.totalorder %s20, 0
      %s265 = scalar_select %p264, %s20, 0
      %s266 = sadd.s32 %s265, %s263
      %s267 = smul.addr %s266, 8
      %s268 = scalar_lea.vmem %s4, %s267
      %p269 = scmp.lt.s32.totalorder %s19, 7
      %s270 = scalar_select %p269, %s19, 7
      %p271 = scmp.lt.s32.totalorder %s20, 0
      %s272 = scalar_select %p271, %s20, 0
      %s273 = sadd.s32 %s272, %s270
      %s274 = smul.addr %s273, 8
      %s275 = scalar_lea.vmem %s0, %s274
      %p276 = scmp.lt.s32.totalorder %s19, 7
      %s277 = scalar_select %p276, %s19, 7
      %p278 = scmp.lt.s32.totalorder %s20, 0
      %s279 = scalar_select %p278, %s20, 0
      %s280 = smul.addr %s277, 56
      %s281 = sadd.s32 %s279, %s280
      %s282 = smul.addr %s281, 8
      %s283 = scalar_lea.vmem %s1, %s282
      %p284 = scmp.lt.s32.totalorder %s19, 7
      %s285 = scalar_select %p284, %s19, 7
      %p286 = scmp.lt.s32.totalorder %s20, 0
      %s287 = scalar_select %p286, %s20, 0
      %s288 = smul.addr %s285, 56
      %s289 = sadd.s32 %s287, %s288
      %s290 = smul.addr %s289, 8
      %s291 = scalar_lea.vmem %s2, %s290
      %p292 = scmp.lt.s32.totalorder %s20, 0
      %s293 = scalar_select %p292, %s20, 0
      %s294 = smul.addr %s293, 8
      %s295 = scalar_lea.vmem %s3, %s294
      %p296 = scmp.lt.s32.totalorder %s19, 7
      %s297 = scalar_select %p296, %s19, 7
      %p298 = scmp.lt.s32.totalorder %s20, 0
      %s299 = scalar_select %p298, %s20, 0
      %s300 = sadd.s32 %s299, %s297
      %s301 = smul.addr %s300, 8
      %s302 = scalar_lea.vmem %s4, %s301
      %v303 = vld [vmem:[%s275] sm:$0xff]
      %v304 = vld [vmem:[%s283] sm:$0xff]
      %v305 = vld [vmem:[%s283 + $0x8] sm:$0xff]
      %v306 = vld [vmem:[%s283 + $0x10] sm:$0xff]
      %v307 = vld [vmem:[%s283 + $0x18] sm:$0xff]
      %v308 = vld [vmem:[%s283 + $0x20] sm:$0xff]
      %v309 = vld [vmem:[%s283 + $0x28] sm:$0xff]
      %v310 = vld [vmem:[%s283 + $0x30] sm:$0x1]
      %v311 = vld [vmem:[%s283 + $0x38] sm:$0xff]
      %v312 = vld [vmem:[%s283 + $0x40] sm:$0xff]
      %v313 = vld [vmem:[%s283 + $0x48] sm:$0xff]
      %v314 = vld [vmem:[%s283 + $0x50] sm:$0xff]
      %v315 = vld [vmem:[%s283 + $0x58] sm:$0xff]
      %v316 = vld [vmem:[%s283 + $0x60] sm:$0xff]
      %v317 = vld [vmem:[%s283 + $0x68] sm:$0x1]
      %v318 = vld [vmem:[%s283 + $0x70] sm:$0xff]
      %v319 = vld [vmem:[%s283 + $0x78] sm:$0xff]
      %v320 = vld [vmem:[%s283 + $0x80] sm:$0xff]
      %v321 = vld [vmem:[%s283 + $0x88] sm:$0xff]
      %v322 = vld [vmem:[%s283 + $0x90] sm:$0xff]
      %v323 = vld [vmem:[%s283 + $0x98] sm:$0xff]
      %v324 = vld [vmem:[%s283 + $0xa0] sm:$0x1]
      %v325 = vld [vmem:[%s283 + $0xa8] sm:$0xff]
      %v326 = vld [vmem:[%s283 + $0xb0] sm:$0xff]
      %v327 = vld [vmem:[%s283 + $0xb8] sm:$0xff]
      %v328 = vld [vmem:[%s283 + $0xc0] sm:$0xff]
      %v329 = vld [vmem:[%s283 + $0xc8] sm:$0xff]
      %v330 = vld [vmem:[%s283 + $0xd0] sm:$0xff]
      %v331 = vld [vmem:[%s283 + $0xd8] sm:$0x1]
      %v332 = vld [vmem:[%s283 + $0xe0] sm:$0xff]
      %v333 = vld [vmem:[%s283 + $0xe8] sm:$0xff]
      %v334 = vld [vmem:[%s283 + $0xf0] sm:$0xff]
      %v335 = vld [vmem:[%s283 + $0xf8] sm:$0xff]
      %v336 = vld [vmem:[%s283 + $0x100] sm:$0xff]
      %v337 = vld [vmem:[%s283 + $0x108] sm:$0xff]
      %v338 = vld [vmem:[%s283 + $0x110] sm:$0x1]
      %v339 = vld [vmem:[%s283 + $0x118] sm:$0xff]
      %v340 = vld [vmem:[%s283 + $0x120] sm:$0xff]
      %v341 = vld [vmem:[%s283 + $0x128] sm:$0xff]
      %v342 = vld [vmem:[%s283 + $0x130] sm:$0xff]
      %v343 = vld [vmem:[%s283 + $0x138] sm:$0xff]
      %v344 = vld [vmem:[%s283 + $0x140] sm:$0xff]
      %v345 = vld [vmem:[%s283 + $0x148] sm:$0x1]
      %v346 = vld [vmem:[%s283 + $0x150] sm:$0xff]
      %v347 = vld [vmem:[%s283 + $0x158] sm:$0xff]
      %v348 = vld [vmem:[%s283 + $0x160] sm:$0xff]
      %v349 = vld [vmem:[%s283 + $0x168] sm:$0xff]
      %v350 = vld [vmem:[%s283 + $0x170] sm:$0xff]
      %v351 = vld [vmem:[%s283 + $0x178] sm:$0xff]
      %v352 = vld [vmem:[%s283 + $0x180] sm:$0x1]
      %v353 = vld [vmem:[%s283 + $0x188] sm:$0xff]
      %v354 = vld [vmem:[%s283 + $0x190] sm:$0xff]
      %v355 = vld [vmem:[%s283 + $0x198] sm:$0xff]
      %v356 = vld [vmem:[%s283 + $0x1a0] sm:$0xff]
      %v357 = vld [vmem:[%s283 + $0x1a8] sm:$0xff]
      %v358 = vld [vmem:[%s283 + $0x1b0] sm:$0xff]
      %v359 = vld [vmem:[%s283 + $0x1b8] sm:$0x1]
      %v360 = vld [vmem:[%s291] sm:$0xff]
      %v361 = vld [vmem:[%s291 + $0x8] sm:$0xff]
      %v362 = vld [vmem:[%s291 + $0x10] sm:$0xff]
      %v363 = vld [vmem:[%s291 + $0x18] sm:$0xff]
      %v364 = vld [vmem:[%s291 + $0x20] sm:$0xff]
      %v365 = vld [vmem:[%s291 + $0x28] sm:$0xff]
      %v366 = vld [vmem:[%s291 + $0x30] sm:$0x1]
      %v367 = vld [vmem:[%s291 + $0x38] sm:$0xff]
      %v368 = vld [vmem:[%s291 + $0x40] sm:$0xff]
      %v369 = vld [vmem:[%s291 + $0x48] sm:$0xff]
      %v370 = vld [vmem:[%s291 + $0x50] sm:$0xff]
      %v371 = vld [vmem:[%s291 + $0x58] sm:$0xff]
      %v372 = vld [vmem:[%s291 + $0x60] sm:$0xff]
      %v373 = vld [vmem:[%s291 + $0x68] sm:$0x1]
      %v374 = vld [vmem:[%s291 + $0x70] sm:$0xff]
      %v375 = vld [vmem:[%s291 + $0x78] sm:$0xff]
      %v376 = vld [vmem:[%s291 + $0x80] sm:$0xff]
      %v377 = vld [vmem:[%s291 + $0x88] sm:$0xff]
      %v378 = vld [vmem:[%s291 + $0x90] sm:$0xff]
      %v379 = vld [vmem:[%s291 + $0x98] sm:$0xff]
      %v380 = vld [vmem:[%s291 + $0xa0] sm:$0x1]
      %v381 = vld [vmem:[%s291 + $0xa8] sm:$0xff]
      %v382 = vld [vmem:[%s291 + $0xb0] sm:$0xff]
      %v383 = vld [vmem:[%s291 + $0xb8] sm:$0xff]
      %v384 = vld [vmem:[%s291 + $0xc0] sm:$0xff]
      %v385 = vld [vmem:[%s291 + $0xc8] sm:$0xff]
      %v386 = vld [vmem:[%s291 + $0xd0] sm:$0xff]
      %v387 = vld [vmem:[%s291 + $0xd8] sm:$0x1]
      %v388 = vld [vmem:[%s291 + $0xe0] sm:$0xff]
      %v389 = vld [vmem:[%s291 + $0xe8] sm:$0xff]
      %v390 = vld [vmem:[%s291 + $0xf0] sm:$0xff]
      %v391 = vld [vmem:[%s291 + $0xf8] sm:$0xff]
      %v392 = vld [vmem:[%s291 + $0x100] sm:$0xff]
      %v393 = vld [vmem:[%s291 + $0x108] sm:$0xff]
      %v394 = vld [vmem:[%s291 + $0x110] sm:$0x1]
      %v395 = vld [vmem:[%s291 + $0x118] sm:$0xff]
      %v396 = vld [vmem:[%s291 + $0x120] sm:$0xff]
      %v397 = vld [vmem:[%s291 + $0x128] sm:$0xff]
      %v398 = vld [vmem:[%s291 + $0x130] sm:$0xff]
      %v399 = vld [vmem:[%s291 + $0x138] sm:$0xff]
      %v400 = vld [vmem:[%s291 + $0x140] sm:$0xff]
      %v401 = vld [vmem:[%s291 + $0x148] sm:$0x1]
      %v402 = vld [vmem:[%s291 + $0x150] sm:$0xff]
      %v403 = vld [vmem:[%s291 + $0x158] sm:$0xff]
      %v404 = vld [vmem:[%s291 + $0x160] sm:$0xff]
      %v405 = vld [vmem:[%s291 + $0x168] sm:$0xff]
      %v406 = vld [vmem:[%s291 + $0x170] sm:$0xff]
      %v407 = vld [vmem:[%s291 + $0x178] sm:$0xff]
      %v408 = vld [vmem:[%s291 + $0x180] sm:$0x1]
      %v409 = vld [vmem:[%s291 + $0x188] sm:$0xff]
      %v410 = vld [vmem:[%s291 + $0x190] sm:$0xff]
      %v411 = vld [vmem:[%s291 + $0x198] sm:$0xff]
      %v412 = vld [vmem:[%s291 + $0x1a0] sm:$0xff]
      %v413 = vld [vmem:[%s291 + $0x1a8] sm:$0xff]
      %v414 = vld [vmem:[%s291 + $0x1b0] sm:$0xff]
      %v415 = vld [vmem:[%s291 + $0x1b8] sm:$0x1]
      %v416 = vld [vmem:[%s295] sm:$0xff]
      %v417 = vld [vmem:[%s295 + $0x8] sm:$0xff]
      %v418 = vld [vmem:[%s295 + $0x10] sm:$0xff]
      %v419 = vld [vmem:[%s295 + $0x18] sm:$0xff]
      %v420 = vld [vmem:[%s295 + $0x20] sm:$0xff]
      %v421 = vld [vmem:[%s295 + $0x28] sm:$0xff]
      %v422 = vld [vmem:[%s295 + $0x30] sm:$0x1]
      %v423 = vld [vmem:[%s295 + $0x38] sm:$0xff]
      %v424 = vld [vmem:[%s295 + $0x40] sm:$0xff]
      %v425 = vld [vmem:[%s295 + $0x48] sm:$0xff]
      %v426 = vld [vmem:[%s295 + $0x50] sm:$0xff]
      %v427 = vld [vmem:[%s295 + $0x58] sm:$0xff]
      %v428 = vld [vmem:[%s295 + $0x60] sm:$0xff]
      %v429 = vld [vmem:[%s295 + $0x68] sm:$0x1]
      %v430 = vld [vmem:[%s295 + $0x70] sm:$0xff]
      %v431 = vld [vmem:[%s295 + $0x78] sm:$0xff]
      %v432 = vld [vmem:[%s295 + $0x80] sm:$0xff]
      %v433 = vld [vmem:[%s295 + $0x88] sm:$0xff]
      %v434 = vld [vmem:[%s295 + $0x90] sm:$0xff]
      %v435 = vld [vmem:[%s295 + $0x98] sm:$0xff]
      %v436 = vld [vmem:[%s295 + $0xa0] sm:$0x1]
      %v437 = vld [vmem:[%s295 + $0xa8] sm:$0xff]
      %v438 = vld [vmem:[%s295 + $0xb0] sm:$0xff]
      %v439 = vld [vmem:[%s295 + $0xb8] sm:$0xff]
      %v440 = vld [vmem:[%s295 + $0xc0] sm:$0xff]
      %v441 = vld [vmem:[%s295 + $0xc8] sm:$0xff]
      %v442 = vld [vmem:[%s295 + $0xd0] sm:$0xff]
      %v443 = vld [vmem:[%s295 + $0xd8] sm:$0x1]
      %v444 = vld [vmem:[%s295 + $0xe0] sm:$0xff]
      %v445 = vld [vmem:[%s295 + $0xe8] sm:$0xff]
      %v446 = vld [vmem:[%s295 + $0xf0] sm:$0xff]
      %v447 = vld [vmem:[%s295 + $0xf8] sm:$0xff]
      %v448 = vld [vmem:[%s295 + $0x100] sm:$0xff]
      %v449 = vld [vmem:[%s295 + $0x108] sm:$0xff]
      %v450 = vld [vmem:[%s295 + $0x110] sm:$0x1]
      %v451 = vld [vmem:[%s295 + $0x118] sm:$0xff]
      %v452 = vld [vmem:[%s295 + $0x120] sm:$0xff]
      %v453 = vld [vmem:[%s295 + $0x128] sm:$0xff]
      %v454 = vld [vmem:[%s295 + $0x130] sm:$0xff]
      %v455 = vld [vmem:[%s295 + $0x138] sm:$0xff]
      %v456 = vld [vmem:[%s295 + $0x140] sm:$0xff]
      %v457 = vld [vmem:[%s295 + $0x148] sm:$0x1]
      %v458 = vld [vmem:[%s295 + $0x150] sm:$0xff]
      %v459 = vld [vmem:[%s295 + $0x158] sm:$0xff]
      %v460 = vld [vmem:[%s295 + $0x160] sm:$0xff]
      %v461 = vld [vmem:[%s295 + $0x168] sm:$0xff]
      %v462 = vld [vmem:[%s295 + $0x170] sm:$0xff]
      %v463 = vld [vmem:[%s295 + $0x178] sm:$0xff]
      %v464 = vld [vmem:[%s295 + $0x180] sm:$0x1]
      %v465 = vld [vmem:[%s295 + $0x188] sm:$0xff]
      %v466 = vld [vmem:[%s295 + $0x190] sm:$0xff]
      %v467 = vld [vmem:[%s295 + $0x198] sm:$0xff]
      %v468 = vld [vmem:[%s295 + $0x1a0] sm:$0xff]
      %v469 = vld [vmem:[%s295 + $0x1a8] sm:$0xff]
      %v470 = vld [vmem:[%s295 + $0x1b0] sm:$0xff]
      %v471 = vld [vmem:[%s295 + $0x1b8] sm:$0x1]
      %v472 = vadd.f32 %v304, %v416
      %v473 = vadd.f32 %v305, %v417
      %v474 = vadd.f32 %v306, %v418
      %v475 = vadd.f32 %v307, %v419
      %v476 = vadd.f32 %v308, %v420
      %v477 = vadd.f32 %v309, %v421
      %v478 = vadd.f32 %v310, %v422
      %v479 = vadd.f32 %v311, %v423
      %v480 = vadd.f32 %v312, %v424
      %v481 = vadd.f32 %v313, %v425
      %v482 = vadd.f32 %v314, %v426
      %v483 = vadd.f32 %v315, %v427
      %v484 = vadd.f32 %v316, %v428
      %v485 = vadd.f32 %v317, %v429
      %v486 = vadd.f32 %v318, %v430
      %v487 = vadd.f32 %v319, %v431
      %v488 = vadd.f32 %v320, %v432
      %v489 = vadd.f32 %v321, %v433
      %v490 = vadd.f32 %v322, %v434
      %v491 = vadd.f32 %v323, %v435
      %v492 = vadd.f32 %v324, %v436
      %v493 = vadd.f32 %v325, %v437
      %v494 = vadd.f32 %v326, %v438
      %v495 = vadd.f32 %v327, %v439
      %v496 = vadd.f32 %v328, %v440
      %v497 = vadd.f32 %v329, %v441
      %v498 = vadd.f32 %v330, %v442
      %v499 = vadd.f32 %v331, %v443
      %v500 = vadd.f32 %v332, %v444
      %v501 = vadd.f32 %v333, %v445
      %v502 = vadd.f32 %v334, %v446
      %v503 = vadd.f32 %v335, %v447
      %v504 = vadd.f32 %v336, %v448
      %v505 = vadd.f32 %v337, %v449
      %v506 = vadd.f32 %v338, %v450
      %v507 = vadd.f32 %v339, %v451
      %v508 = vadd.f32 %v340, %v452
      %v509 = vadd.f32 %v341, %v453
      %v510 = vadd.f32 %v342, %v454
      %v511 = vadd.f32 %v343, %v455
      %v512 = vadd.f32 %v344, %v456
      %v513 = vadd.f32 %v345, %v457
      %v514 = vadd.f32 %v346, %v458
      %v515 = vadd.f32 %v347, %v459
      %v516 = vadd.f32 %v348, %v460
      %v517 = vadd.f32 %v349, %v461
      %v518 = vadd.f32 %v350, %v462
      %v519 = vadd.f32 %v351, %v463
      %v520 = vadd.f32 %v352, %v464
      %v521 = vadd.f32 %v353, %v465
      %v522 = vadd.f32 %v354, %v466
      %v523 = vadd.f32 %v355, %v467
      %v524 = vadd.f32 %v356, %v468
      %v525 = vadd.f32 %v357, %v469
      %v526 = vadd.f32 %v358, %v470
      %v527 = vadd.f32 %v359, %v471
      %v529 = vcombine.high %v303, %v303
      %v531 = vunpack.c.l.s4 1966171168
      %v532 = vunpack.c.0.s8 %v531
      %v533 = vlaneseq
      %v534 = vshrl.u32 %v533, 7
      %v535 = vsub.s32 %v532, %v534
      %v536 = vrot.slane %v303, %v535
      %v538 = vunpack.c.l.s4 1966171168
      %v539 = vunpack.c.0.s8 %v538
      %v540 = vlaneseq
      %v541 = vshrl.u32 %v540, 7
      %v542 = vsub.s32 %v539, %v541
      %v543 = vrot.slane %v529, %v542
      %v544 = vcombine.high %v536, %v536
      %v545 = vcombine.high %v543, %v543
      %v547 = vunpack.c.l.s4 1966171168
      %v548 = vunpack.c.0.s8 %v547
      %v549 = vlaneseq
      %v550 = vshrl.u32 %v549, 7
      %v551 = vsub.s32 %v548, %v550
      %v552 = vrot.slane %v536, %v551
      %v554 = vunpack.c.l.s4 1966171168
      %v555 = vunpack.c.0.s8 %v554
      %v556 = vlaneseq
      %v557 = vshrl.u32 %v556, 7
      %v558 = vsub.s32 %v555, %v557
      %v559 = vrot.slane %v543, %v558
      %v561 = vunpack.c.l.s4 1966171168
      %v562 = vunpack.c.0.s8 %v561
      %v563 = vlaneseq
      %v564 = vshrl.u32 %v563, 7
      %v565 = vsub.s32 %v562, %v564
      %v566 = vrot.slane %v544, %v565
      %v568 = vunpack.c.l.s4 1966171168
      %v569 = vunpack.c.0.s8 %v568
      %v570 = vlaneseq
      %v571 = vshrl.u32 %v570, 7
      %v572 = vsub.s32 %v569, %v571
      %v573 = vrot.slane %v545, %v572
      %v574 = vcombine.high %v552, %v552
      %v575 = vcombine.high %v559, %v559
      %v576 = vcombine.high %v566, %v566
      %v577 = vcombine.high %v573, %v573
      %v578 = vlaneseq
      %v579 = vshrl.u32 %v578, 7
      %v580 = vsub.s32 0, %v579
      %v581 = vrot.slane %v552, %v580
      %v582 = vlaneseq
      %v583 = vshrl.u32 %v582, 7
      %v584 = vsub.s32 0, %v583
      %v585 = vrot.slane %v566, %v584
      %v586 = vlaneseq
      %v587 = vshrl.u32 %v586, 7
      %v588 = vsub.s32 0, %v587
      %v589 = vrot.slane %v574, %v588
      %v590 = vlaneseq
      %v591 = vshrl.u32 %v590, 7
      %v592 = vsub.s32 0, %v591
      %v593 = vrot.slane %v576, %v592
      %v594 = vlaneseq
      %v595 = vshrl.u32 %v594, 7
      %v596 = vsub.s32 0, %v595
      %v597 = vrot.slane %v559, %v596
      %v598 = vlaneseq
      %v599 = vshrl.u32 %v598, 7
      %v600 = vsub.s32 0, %v599
      %v601 = vrot.slane %v573, %v600
      %v602 = vlaneseq
      %v603 = vshrl.u32 %v602, 7
      %v604 = vsub.s32 0, %v603
      %v605 = vrot.slane %v575, %v604
      %v606 = vlaneseq
      %v607 = vshrl.u32 %v606, 7
      %v608 = vsub.s32 0, %v607
      %v609 = vrot.slane %v577, %v608
      %v618 = vmul.f32 %v581, %v472
      %v619 = vmul.f32 %v581, %v473
      %v620 = vmul.f32 %v581, %v474
      %v621 = vmul.f32 %v581, %v475
      %v622 = vmul.f32 %v581, %v476
      %v623 = vmul.f32 %v581, %v477
      %v624 = vmul.f32 %v581, %v478
      %v625 = vmul.f32 %v585, %v479
      %v626 = vmul.f32 %v585, %v480
      %v627 = vmul.f32 %v585, %v481
      %v628 = vmul.f32 %v585, %v482
      %v629 = vmul.f32 %v585, %v483
      %v630 = vmul.f32 %v585, %v484
      %v631 = vmul.f32 %v585, %v485
      %v632 = vmul.f32 %v589, %v486
      %v633 = vmul.f32 %v589, %v487
      %v634 = vmul.f32 %v589, %v488
      %v635 = vmul.f32 %v589, %v489
      %v636 = vmul.f32 %v589, %v490
      %v637 = vmul.f32 %v589, %v491
      %v638 = vmul.f32 %v589, %v492
      %v639 = vmul.f32 %v593, %v493
      %v640 = vmul.f32 %v593, %v494
      %v641 = vmul.f32 %v593, %v495
      %v642 = vmul.f32 %v593, %v496
      %v643 = vmul.f32 %v593, %v497
      %v644 = vmul.f32 %v593, %v498
      %v645 = vmul.f32 %v593, %v499
      %v646 = vmul.f32 %v597, %v500
      %v647 = vmul.f32 %v597, %v501
      %v648 = vmul.f32 %v597, %v502
      %v649 = vmul.f32 %v597, %v503
      %v650 = vmul.f32 %v597, %v504
      %v651 = vmul.f32 %v597, %v505
      %v652 = vmul.f32 %v597, %v506
      %v653 = vmul.f32 %v601, %v507
      %v654 = vmul.f32 %v601, %v508
      %v655 = vmul.f32 %v601, %v509
      %v656 = vmul.f32 %v601, %v510
      %v657 = vmul.f32 %v601, %v511
      %v658 = vmul.f32 %v601, %v512
      %v659 = vmul.f32 %v601, %v513
      %v660 = vmul.f32 %v605, %v514
      %v661 = vmul.f32 %v605, %v515
      %v662 = vmul.f32 %v605, %v516
      %v663 = vmul.f32 %v605, %v517
      %v664 = vmul.f32 %v605, %v518
      %v665 = vmul.f32 %v605, %v519
      %v666 = vmul.f32 %v605, %v520
      %v667 = vmul.f32 %v609, %v521
      %v668 = vmul.f32 %v609, %v522
      %v669 = vmul.f32 %v609, %v523
      %v670 = vmul.f32 %v609, %v524
      %v671 = vmul.f32 %v609, %v525
      %v672 = vmul.f32 %v609, %v526
      %v673 = vmul.f32 %v609, %v527
      %vm674 = vcmask 523264
      %v675 = vsel %vm674, %v618, 0.0
      %v676 = vsel %vm674, %v625, 0.0
      %v677 = vadd.f32 %v675, %v676
      %v678 = vsel %vm674, %v632, 0.0
      %v679 = vadd.f32 %v677, %v678
      %v680 = vsel %vm674, %v639, 0.0
      %v681 = vadd.f32 %v679, %v680
      %v682 = vsel %vm674, %v646, 0.0
      %v683 = vadd.f32 %v681, %v682
      %v684 = vsel %vm674, %v653, 0.0
      %v685 = vadd.f32 %v683, %v684
      %v686 = vsel %vm674, %v660, 0.0
      %v687 = vadd.f32 %v685, %v686
      %v688 = vsel %vm674, %v667, 0.0
      %v689 = vadd.f32 %v687, %v688
      %v690 = vsel %vm674, %v619, 0.0
      %v691 = vsel %vm674, %v626, 0.0
      %v692 = vadd.f32 %v690, %v691
      %v693 = vsel %vm674, %v633, 0.0
      %v694 = vadd.f32 %v692, %v693
      %v695 = vsel %vm674, %v640, 0.0
      %v696 = vadd.f32 %v694, %v695
      %v697 = vsel %vm674, %v647, 0.0
      %v698 = vadd.f32 %v696, %v697
      %v699 = vsel %vm674, %v654, 0.0
      %v700 = vadd.f32 %v698, %v699
      %v701 = vsel %vm674, %v661, 0.0
      %v702 = vadd.f32 %v700, %v701
      %v703 = vsel %vm674, %v668, 0.0
      %v704 = vadd.f32 %v702, %v703
      %v705 = vsel %vm674, %v620, 0.0
      %v706 = vsel %vm674, %v627, 0.0
      %v707 = vadd.f32 %v705, %v706
      %v708 = vsel %vm674, %v634, 0.0
      %v709 = vadd.f32 %v707, %v708
      %v710 = vsel %vm674, %v641, 0.0
      %v711 = vadd.f32 %v709, %v710
      %v712 = vsel %vm674, %v648, 0.0
      %v713 = vadd.f32 %v711, %v712
      %v714 = vsel %vm674, %v655, 0.0
      %v715 = vadd.f32 %v713, %v714
      %v716 = vsel %vm674, %v662, 0.0
      %v717 = vadd.f32 %v715, %v716
      %v718 = vsel %vm674, %v669, 0.0
      %v719 = vadd.f32 %v717, %v718
      %v720 = vsel %vm674, %v621, 0.0
      %v721 = vsel %vm674, %v628, 0.0
      %v722 = vadd.f32 %v720, %v721
      %v723 = vsel %vm674, %v635, 0.0
      %v724 = vadd.f32 %v722, %v723
      %v725 = vsel %vm674, %v642, 0.0
      %v726 = vadd.f32 %v724, %v725
      %v727 = vsel %vm674, %v649, 0.0
      %v728 = vadd.f32 %v726, %v727
      %v729 = vsel %vm674, %v656, 0.0
      %v730 = vadd.f32 %v728, %v729
      %v731 = vsel %vm674, %v663, 0.0
      %v732 = vadd.f32 %v730, %v731
      %v733 = vsel %vm674, %v670, 0.0
      %v734 = vadd.f32 %v732, %v733
      %v735 = vsel %vm674, %v622, 0.0
      %v736 = vsel %vm674, %v629, 0.0
      %v737 = vadd.f32 %v735, %v736
      %v738 = vsel %vm674, %v636, 0.0
      %v739 = vadd.f32 %v737, %v738
      %v740 = vsel %vm674, %v643, 0.0
      %v741 = vadd.f32 %v739, %v740
      %v742 = vsel %vm674, %v650, 0.0
      %v743 = vadd.f32 %v741, %v742
      %v744 = vsel %vm674, %v657, 0.0
      %v745 = vadd.f32 %v743, %v744
      %v746 = vsel %vm674, %v664, 0.0
      %v747 = vadd.f32 %v745, %v746
      %v748 = vsel %vm674, %v671, 0.0
      %v749 = vadd.f32 %v747, %v748
      %v750 = vsel %vm674, %v623, 0.0
      %v751 = vsel %vm674, %v630, 0.0
      %v752 = vadd.f32 %v750, %v751
      %v753 = vsel %vm674, %v637, 0.0
      %v754 = vadd.f32 %v752, %v753
      %v755 = vsel %vm674, %v644, 0.0
      %v756 = vadd.f32 %v754, %v755
      %v757 = vsel %vm674, %v651, 0.0
      %v758 = vadd.f32 %v756, %v757
      %v759 = vsel %vm674, %v658, 0.0
      %v760 = vadd.f32 %v758, %v759
      %v761 = vsel %vm674, %v665, 0.0
      %v762 = vadd.f32 %v760, %v761
      %v763 = vsel %vm674, %v672, 0.0
      %v764 = vadd.f32 %v762, %v763
      %vm765 = vcmask 516096
      %v766 = vsel %vm765, %v624, 0.0
      %v767 = vsel %vm765, %v631, 0.0
      %v768 = vadd.f32 %v766, %v767
      %v769 = vsel %vm765, %v638, 0.0
      %v770 = vadd.f32 %v768, %v769
      %v771 = vsel %vm765, %v645, 0.0
      %v772 = vadd.f32 %v770, %v771
      %v773 = vsel %vm765, %v652, 0.0
      %v774 = vadd.f32 %v772, %v773
      %v775 = vsel %vm765, %v659, 0.0
      %v776 = vadd.f32 %v774, %v775
      %v777 = vsel %vm765, %v666, 0.0
      %v778 = vadd.f32 %v776, %v777
      %v779 = vsel %vm765, %v673, 0.0
      %v780 = vadd.f32 %v778, %v779
      %v781 = vsel %vm674, %v689, -inf
      %v782 = vsel %vm674, %v704, -inf
      %v783 = vsel %vm674, %v719, -inf
      %v784 = vsel %vm674, %v734, -inf
      %v785 = vsel %vm674, %v749, -inf
      %v786 = vmax.f32 %v781, %v785
      %v787 = vsel %vm674, %v764, -inf
      %v788 = vmax.f32 %v782, %v787
      %v789 = vsel %vm765, %v780, -inf
      %v790 = vmax.f32 %v783, %v789
      %v791 = vmax.f32 %v786, %v788
      %v792 = vmax.f32 %v790, %v784
      %v793 = vmax.f32 %v791, %v792
      %v794 = vrot.slane %v793, 4
      %v795 = vmax.f32 %v793, %v794
      %v796 = vrot.slane %v795, 2
      %v797 = vmax.f32 %v795, %v796
      %v798 = vrot.slane %v797, 1
      %v799 = vmax.f32 %v797, %v798
      %v800 = vsub.f32 %v689, %v799
      %v801 = vsub.f32 %v704, %v799
      %v802 = vsub.f32 %v719, %v799
      %v803 = vsub.f32 %v734, %v799
      %v804 = vsub.f32 %v749, %v799
      %v805 = vsub.f32 %v764, %v799
      %v806 = vsub.f32 %v780, %v799
      %v807 = vmul.f32 %v800, 1.442695
      %v808 = vpow.pop %v807
      %v809 = vmul.f32 %v801, 1.442695
      %v810 = vpow.pop %v809
      %v811 = vmul.f32 %v802, 1.442695
      %v812 = vpow.pop %v811
      %v813 = vmul.f32 %v803, 1.442695
      %v814 = vpow.pop %v813
      %v815 = vmul.f32 %v804, 1.442695
      %v816 = vpow.pop %v815
      %v817 = vmul.f32 %v805, 1.442695
      %v818 = vpow.pop %v817
      %v819 = vmul.f32 %v806, 1.442695
      %v820 = vpow.pop %v819
      %v821 = vsel %vm674, %v808, 0.0
      %v822 = vsel %vm674, %v810, 0.0
      %v823 = vadd.f32 %v821, %v822
      %v824 = vsel %vm674, %v812, 0.0
      %v825 = vadd.f32 %v823, %v824
      %v826 = vsel %vm674, %v814, 0.0
      %v827 = vadd.f32 %v825, %v826
      %v828 = vsel %vm674, %v816, 0.0
      %v829 = vadd.f32 %v827, %v828
      %v830 = vsel %vm674, %v818, 0.0
      %v831 = vadd.f32 %v829, %v830
      %v832 = vsel %vm765, %v820, 0.0
      %v833 = vadd.f32 %v831, %v832
      %v834 = vrot.slane %v833, 4
      %v835 = vadd.f32 %v833, %v834
      %v836 = vrot.slane %v835, 2
      %v837 = vadd.f32 %v835, %v836
      %v838 = vrot.slane %v837, 1
      %v839 = vadd.f32 %v837, %v838
      %v840 = vrcp.pop %v839
      %v841 = vmul.f32 %v808, %v840
      %v842 = vmul.f32 %v810, %v840
      %v843 = vmul.f32 %v812, %v840
      %v844 = vmul.f32 %v814, %v840
      %v845 = vmul.f32 %v816, %v840
      %v846 = vmul.f32 %v818, %v840
      %v847 = vmul.f32 %v820, %v840
      %v848 = vmul.f32 %v841, %v360
      %v849 = vmul.f32 %v842, %v361
      %v850 = vmul.f32 %v843, %v362
      %v851 = vmul.f32 %v844, %v363
      %v852 = vmul.f32 %v845, %v364
      %v853 = vmul.f32 %v846, %v365
      %v854 = vmul.f32 %v847, %v366
      %v855 = vmul.f32 %v841, %v367
      %v856 = vmul.f32 %v842, %v368
      %v857 = vmul.f32 %v843, %v369
      %v858 = vmul.f32 %v844, %v370
      %v859 = vmul.f32 %v845, %v371
      %v860 = vmul.f32 %v846, %v372
      %v861 = vmul.f32 %v847, %v373
      %v862 = vmul.f32 %v841, %v374
      %v863 = vmul.f32 %v842, %v375
      %v864 = vmul.f32 %v843, %v376
      %v865 = vmul.f32 %v844, %v377
      %v866 = vmul.f32 %v845, %v378
      %v867 = vmul.f32 %v846, %v379
      %v868 = vmul.f32 %v847, %v380
      %v869 = vmul.f32 %v841, %v381
      %v870 = vmul.f32 %v842, %v382
      %v871 = vmul.f32 %v843, %v383
      %v872 = vmul.f32 %v844, %v384
      %v873 = vmul.f32 %v845, %v385
      %v874 = vmul.f32 %v846, %v386
      %v875 = vmul.f32 %v847, %v387
      %v876 = vmul.f32 %v841, %v388
      %v877 = vmul.f32 %v842, %v389
      %v878 = vmul.f32 %v843, %v390
      %v879 = vmul.f32 %v844, %v391
      %v880 = vmul.f32 %v845, %v392
      %v881 = vmul.f32 %v846, %v393
      %v882 = vmul.f32 %v847, %v394
      %v883 = vmul.f32 %v841, %v395
      %v884 = vmul.f32 %v842, %v396
      %v885 = vmul.f32 %v843, %v397
      %v886 = vmul.f32 %v844, %v398
      %v887 = vmul.f32 %v845, %v399
      %v888 = vmul.f32 %v846, %v400
      %v889 = vmul.f32 %v847, %v401
      %v890 = vmul.f32 %v841, %v402
      %v891 = vmul.f32 %v842, %v403
      %v892 = vmul.f32 %v843, %v404
      %v893 = vmul.f32 %v844, %v405
      %v894 = vmul.f32 %v845, %v406
      %v895 = vmul.f32 %v846, %v407
      %v896 = vmul.f32 %v847, %v408
      %v897 = vmul.f32 %v841, %v409
      %v898 = vmul.f32 %v842, %v410
      %v899 = vmul.f32 %v843, %v411
      %v900 = vmul.f32 %v844, %v412
      %v901 = vmul.f32 %v845, %v413
      %v902 = vmul.f32 %v846, %v414
      %v903 = vmul.f32 %v847, %v415
      %v904 = vsel %vm674, %v848, 0.0
      %v905 = vsel %vm674, %v849, 0.0
      %v906 = vadd.f32 %v904, %v905
      %v907 = vsel %vm674, %v850, 0.0
      %v908 = vadd.f32 %v906, %v907
      %v909 = vsel %vm674, %v851, 0.0
      %v910 = vadd.f32 %v908, %v909
      %v911 = vsel %vm674, %v852, 0.0
      %v912 = vadd.f32 %v910, %v911
      %v913 = vsel %vm674, %v853, 0.0
      %v914 = vadd.f32 %v912, %v913
      %v915 = vsel %vm765, %v854, 0.0
      %v916 = vadd.f32 %v914, %v915
      %v917 = vrot.slane %v916, 4
      %v918 = vadd.f32 %v916, %v917
      %v919 = vrot.slane %v918, 2
      %v920 = vadd.f32 %v918, %v919
      %v921 = vrot.slane %v920, 1
      %v922 = vadd.f32 %v920, %v921
      %v923 = vsel %vm674, %v855, 0.0
      %v924 = vsel %vm674, %v856, 0.0
      %v925 = vadd.f32 %v923, %v924
      %v926 = vsel %vm674, %v857, 0.0
      %v927 = vadd.f32 %v925, %v926
      %v928 = vsel %vm674, %v858, 0.0
      %v929 = vadd.f32 %v927, %v928
      %v930 = vsel %vm674, %v859, 0.0
      %v931 = vadd.f32 %v929, %v930
      %v932 = vsel %vm674, %v860, 0.0
      %v933 = vadd.f32 %v931, %v932
      %v934 = vsel %vm765, %v861, 0.0
      %v935 = vadd.f32 %v933, %v934
      %v936 = vrot.slane %v935, 4
      %v937 = vadd.f32 %v935, %v936
      %v938 = vrot.slane %v937, 2
      %v939 = vadd.f32 %v937, %v938
      %v940 = vrot.slane %v939, 1
      %v941 = vadd.f32 %v939, %v940
      %v942 = vsel %vm674, %v862, 0.0
      %v943 = vsel %vm674, %v863, 0.0
      %v944 = vadd.f32 %v942, %v943
      %v945 = vsel %vm674, %v864, 0.0
      %v946 = vadd.f32 %v944, %v945
      %v947 = vsel %vm674, %v865, 0.0
      %v948 = vadd.f32 %v946, %v947
      %v949 = vsel %vm674, %v866, 0.0
      %v950 = vadd.f32 %v948, %v949
      %v951 = vsel %vm674, %v867, 0.0
      %v952 = vadd.f32 %v950, %v951
      %v953 = vsel %vm765, %v868, 0.0
      %v954 = vadd.f32 %v952, %v953
      %v955 = vrot.slane %v954, 4
      %v956 = vadd.f32 %v954, %v955
      %v957 = vrot.slane %v956, 2
      %v958 = vadd.f32 %v956, %v957
      %v959 = vrot.slane %v958, 1
      %v960 = vadd.f32 %v958, %v959
      %v961 = vsel %vm674, %v869, 0.0
      %v962 = vsel %vm674, %v870, 0.0
      %v963 = vadd.f32 %v961, %v962
      %v964 = vsel %vm674, %v871, 0.0
      %v965 = vadd.f32 %v963, %v964
      %v966 = vsel %vm674, %v872, 0.0
      %v967 = vadd.f32 %v965, %v966
      %v968 = vsel %vm674, %v873, 0.0
      %v969 = vadd.f32 %v967, %v968
      %v970 = vsel %vm674, %v874, 0.0
      %v971 = vadd.f32 %v969, %v970
      %v972 = vsel %vm765, %v875, 0.0
      %v973 = vadd.f32 %v971, %v972
      %v974 = vrot.slane %v973, 4
      %v975 = vadd.f32 %v973, %v974
      %v976 = vrot.slane %v975, 2
      %v977 = vadd.f32 %v975, %v976
      %v978 = vrot.slane %v977, 1
      %v979 = vadd.f32 %v977, %v978
      %v980 = vsel %vm674, %v876, 0.0
      %v981 = vsel %vm674, %v877, 0.0
      %v982 = vadd.f32 %v980, %v981
      %v983 = vsel %vm674, %v878, 0.0
      %v984 = vadd.f32 %v982, %v983
      %v985 = vsel %vm674, %v879, 0.0
      %v986 = vadd.f32 %v984, %v985
      %v987 = vsel %vm674, %v880, 0.0
      %v988 = vadd.f32 %v986, %v987
      %v989 = vsel %vm674, %v881, 0.0
      %v990 = vadd.f32 %v988, %v989
      %v991 = vsel %vm765, %v882, 0.0
      %v992 = vadd.f32 %v990, %v991
      %v993 = vrot.slane %v992, 4
      %v994 = vadd.f32 %v992, %v993
      %v995 = vrot.slane %v994, 2
      %v996 = vadd.f32 %v994, %v995
      %v997 = vrot.slane %v996, 1
      %v998 = vadd.f32 %v996, %v997
      %v999 = vsel %vm674, %v883, 0.0
      %v1000 = vsel %vm674, %v884, 0.0
      %v1001 = vadd.f32 %v999, %v1000
      %v1002 = vsel %vm674, %v885, 0.0
      %v1003 = vadd.f32 %v1001, %v1002
      %v1004 = vsel %vm674, %v886, 0.0
      %v1005 = vadd.f32 %v1003, %v1004
      %v1006 = vsel %vm674, %v887, 0.0
      %v1007 = vadd.f32 %v1005, %v1006
      %v1008 = vsel %vm674, %v888, 0.0
      %v1009 = vadd.f32 %v1007, %v1008
      %v1010 = vsel %vm765, %v889, 0.0
      %v1011 = vadd.f32 %v1009, %v1010
      %v1012 = vrot.slane %v1011, 4
      %v1013 = vadd.f32 %v1011, %v1012
      %v1014 = vrot.slane %v1013, 2
      %v1015 = vadd.f32 %v1013, %v1014
      %v1016 = vrot.slane %v1015, 1
      %v1017 = vadd.f32 %v1015, %v1016
      %v1018 = vsel %vm674, %v890, 0.0
      %v1019 = vsel %vm674, %v891, 0.0
      %v1020 = vadd.f32 %v1018, %v1019
      %v1021 = vsel %vm674, %v892, 0.0
      %v1022 = vadd.f32 %v1020, %v1021
      %v1023 = vsel %vm674, %v893, 0.0
      %v1024 = vadd.f32 %v1022, %v1023
      %v1025 = vsel %vm674, %v894, 0.0
      %v1026 = vadd.f32 %v1024, %v1025
      %v1027 = vsel %vm674, %v895, 0.0
      %v1028 = vadd.f32 %v1026, %v1027
      %v1029 = vsel %vm765, %v896, 0.0
      %v1030 = vadd.f32 %v1028, %v1029
      %v1031 = vrot.slane %v1030, 4
      %v1032 = vadd.f32 %v1030, %v1031
      %v1033 = vrot.slane %v1032, 2
      %v1034 = vadd.f32 %v1032, %v1033
      %v1035 = vrot.slane %v1034, 1
      %v1036 = vadd.f32 %v1034, %v1035
      %v1037 = vsel %vm674, %v897, 0.0
      %v1038 = vsel %vm674, %v898, 0.0
      %v1039 = vadd.f32 %v1037, %v1038
      %v1040 = vsel %vm674, %v899, 0.0
      %v1041 = vadd.f32 %v1039, %v1040
      %v1042 = vsel %vm674, %v900, 0.0
      %v1043 = vadd.f32 %v1041, %v1042
      %v1044 = vsel %vm674, %v901, 0.0
      %v1045 = vadd.f32 %v1043, %v1044
      %v1046 = vsel %vm674, %v902, 0.0
      %v1047 = vadd.f32 %v1045, %v1046
      %v1048 = vsel %vm765, %v903, 0.0
      %v1049 = vadd.f32 %v1047, %v1048
      %v1050 = vrot.slane %v1049, 4
      %v1051 = vadd.f32 %v1049, %v1050
      %v1052 = vrot.slane %v1051, 2
      %v1053 = vadd.f32 %v1051, %v1052
      %v1054 = vrot.slane %v1053, 1
      %v1055 = vadd.f32 %v1053, %v1054
      %vm1064 = vcmask 1041409
      %v1065 = vsel %vm1064, %v941, %v922
      %vm1066 = vcmask 1042434
      %v1067 = vsel %vm1066, %v960, %v1065
      %vm1068 = vcmask 1043459
      %v1069 = vsel %vm1068, %v979, %v1067
      %vm1070 = vcmask 1044484
      %v1071 = vsel %vm1070, %v998, %v1069
      %vm1072 = vcmask 1045509
      %v1073 = vsel %vm1072, %v1017, %v1071
      %vm1074 = vcmask 1046534
      %v1075 = vsel %vm1074, %v1036, %v1073
      %vm1076 = vcmask 1047559
      %v1077 = vsel %vm1076, %v1055, %v1075
      %1079 = vst.msk [vmem:[%s302] sm:$0xff] %vm674, %v1077
      %p1080 = scmp.lt.s32.totalorder %s19, 7
      %s1081 = scalar_select %p1080, %s19, 7
      %p1082 = scmp.lt.s32.totalorder %s20, 0
      %s1083 = scalar_select %p1082, %s20, 0
      %s1084 = sadd.s32 %s1083, %s1081
      %s1085 = smul.addr %s1084, 8
      %s1086 = scalar_lea.vmem %s4, %s1085
      // Predicated region
      $region37: #{dmodule_forward.9} parent=35 // pred_check
        %p1087 = pneg %p157
      $region38: #{dmodule_forward.9} parent=35 // pred_check_branch
        %1089 = sbr.rel (%p1087) target = $region40
      $region39: #{dmodule_forward.9} parent=35 // pred_region
        _
      $region40: #{dmodule_forward.9} parent=35 // pred_fallthru
        _
    $region36: #{dmodule_forward.9} parent=5 // pred_fallthru
      _
    %p1090 = scmp.le.s32.totalorder 2, %s10
    // Predicated region
    $region41: #{dmodule_forward.9} parent=5 // pred_check
      %p1091 = pneg %p1090
    $region42: #{dmodule_forward.9} parent=5 // pred_check_branch
      %1093 = sbr.rel (%p1091) target = $region44
    $region43: #{dmodule_forward.9} parent=5 // pred_region
      %s1094 = ssub.s32 %s10, 2
      // Predicated region
      $region45: #{dmodule_forward.9} parent=43 // pred_check
        %p1095 = pneg %p163
      $region46: #{dmodule_forward.9} parent=43 // pred_check_branch
        %1097 = sbr.rel (%p1095) target = $region48
      $region47: #{dmodule_forward.9} parent=43 // pred_region
        %p1098 = scmp.lt.s32.totalorder %s21, 7
        %s1099 = scalar_select %p1098, %s21, 7
        %p1100 = scmp.lt.s32.totalorder %s22, 0
        %s1101 = scalar_select %p1100, %s22, 0
        %s1102 = sadd.s32 %s1101, %s1099
        %s1103 = smul.addr %s1102, 8
        %s1104 = scalar_lea.vmem %s4, %s1103
      $region48: #{dmodule_forward.9} parent=43 // pred_fallthru
        _
    $region44: #{dmodule_forward.9} parent=5 // pred_fallthru
      _
  $region6: #{dmodule_forward.9} parent=0 // loop_footer
    %s14 = sadd.s32 1, %s10
  $region7: #{dmodule_forward.9} parent=0 // loop_footer_branch
    %9 = sbr.rel target = $region3
  $region8: #{dmodule_forward.9} parent=0 // loop_exit
    _

</llo_original>
